<compile_context>
chip_gen: v7x
topology: tpu7x:2x2x1
jax: 0.10.0
libtpu: 0.0.40
codegen_flags: <defaults>
</compile_context>

<pallas_src>
import functools

import jax
import jax.numpy as jnp
from jax.experimental import pallas as pl
from jax.experimental.pallas import tpu as pltpu


# ----------------------------------------------------------------------------
# Pallas kernel: row-tiled BOURNE forward
# ----------------------------------------------------------------------------
def make_bourne_kernel(*, batch_size: int, g_pad: int, tile_m: int):
    f32 = jnp.float32
    bf16 = jnp.bfloat16

    def kernel(gid_ref,                       # (1, TM)    int32 group id (-1 = not a context node)
               a2_ref,                        # (TM, Np)   bf16  A2 row slab
               x2_ref, w_tg_ref, b_tg_ref,    # target-path features / weights
               a1_ref, x1_ref,                # (B, Np), (Np, Fin)  online-path (only B rows of A1)
               w_on_ref, b_on_ref, w_pr_ref, b_pr_ref,
               h_n1_ref, emb2_head_ref, h_sub2_ref,
               xw2_s, seg_sum_s, seg_cnt_s):
        i = pl.program_id(0)

        # ------------------------------------------------------------------
        # One-time work on the first row tile.  All of these inputs have
        # constant block indices, so the pipeline DMAs them only once.
        # ------------------------------------------------------------------
        @pl.when(i == 0)
        def _init():
            # Reassociated target-path first matmul: xw2 = X2 @ W_tg  (Np, H)
            xw2_s[...] = jnp.dot(x2_ref[...], w_tg_ref[...],
                                 preferred_element_type=f32).astype(bf16)
            seg_sum_s[...] = jnp.zeros_like(seg_sum_s)
            seg_cnt_s[...] = jnp.zeros_like(seg_cnt_s)

            # Online path — only the B rows that BOURNE.forward returns.
            ax1 = jnp.dot(a1_ref[...], x1_ref[...],
                          preferred_element_type=f32)                       # (B, Fin)
            e1 = jnp.maximum(
                jnp.dot(ax1.astype(bf16), w_on_ref[...],
                        preferred_element_type=f32) + b_on_ref[...], 0.0)   # (B, Hon)
            h_n1_ref[...] = jnp.dot(e1.astype(bf16), w_pr_ref[...],
                                    preferred_element_type=f32) + b_pr_ref[...]
            # TODO(synk): h_sub_1 (readout of the online path) is never returned
            # by BOURNE.forward, so it is intentionally not computed (dead work).

        # ------------------------------------------------------------------
        # Target path, row tile i: e2 = relu(A2[tile] @ xw2 + b_tg)
        # ------------------------------------------------------------------
        e2 = jnp.maximum(
            jnp.dot(a2_ref[...], xw2_s[...],
                    preferred_element_type=f32) + b_tg_ref[...], 0.0)       # (TM, H) f32

        @pl.when(i == 0)
        def _head():
            # node_emb_2[:B, :] lives entirely in the first row tile (B <= TM).
            emb2_head_ref[...] = e2[:batch_size, :]

        # ------------------------------------------------------------------
        # MyReadout(e2[:-B, :], batch2, 'mean') — segment sum via an in-kernel
        # one-hot tile (built on the VPU, contracted on the MXU).  Rows whose
        # group id is -1 (anchor/batch rows and padding) contribute nothing.
        # ------------------------------------------------------------------
        gids = gid_ref[...]                                                 # (1, TM) int32
        groups = jax.lax.broadcasted_iota(jnp.int32, (g_pad, tile_m), 0)    # (G, TM)
        oh_f32 = jnp.where(gids == groups, 1.0, 0.0)                        # (G, TM) f32
        one_hot = oh_f32.astype(bf16)                                       # 0/1 exact in bf16

        seg_sum_s[...] += jnp.dot(one_hot, e2.astype(bf16),
                                  preferred_element_type=f32)               # (G, H)
        seg_cnt_s[...] += jnp.sum(oh_f32, axis=1, keepdims=True)            # (G, 1)

        @pl.when(i == pl.num_programs(0) - 1)
        def _finalize():
            # scatter_reduce_('mean', include_self=True) over zeros -> sum/(cnt+1)
            inv = pl.reciprocal(seg_cnt_s[...] + 1.0, approx=True)
            h_sub2_ref[...] = seg_sum_s[...] * inv

    return kernel


# ----------------------------------------------------------------------------
# Wrapper: padding, dtype casts, BlockSpecs, pallas_call
# ----------------------------------------------------------------------------
def _pad2(x, rows, cols):
    return jnp.pad(x, ((0, rows - x.shape[0]), (0, cols - x.shape[1])))


def bourne_forward(a1, x1, a2, x2, batch2, params, *,
                   batch_size, num_groups, tile_m=128):
    num_nodes, feat_in = x1.shape
    n_sub = num_nodes - batch_size
    assert batch_size % 8 == 0, "batch_size must be a multiple of 8"
    assert batch_size <= tile_m, "batch_size must fit in one row tile"

    n_pad = pl.cdiv(num_nodes, tile_m) * tile_m
    g_pad = pl.cdiv(num_groups, 8) * 8

    f32, bf16 = jnp.float32, jnp.bfloat16

    # Only the last B rows of the online path are returned -> (B, N) slab of A1.
    a1_tail = _pad2(a1[n_sub:, :], batch_size, n_pad).astype(bf16)
    x1_p = _pad2(x1, n_pad, feat_in).astype(bf16)
    a2_p = _pad2(a2, n_pad, n_pad).astype(bf16)
    x2_p = _pad2(x2, n_pad, feat_in).astype(bf16)

    # Group id per node row: batch2 for context nodes, -1 for anchor/pad rows.
    gid = jnp.full((1, n_pad), -1, jnp.int32)
    gid = gid.at[0, :n_sub].set(batch2.astype(jnp.int32))

    w_on = params["w_on"].astype(bf16)
    b_on = params["b_on"].astype(f32)
    w_pr = params["w_pr"].astype(bf16)
    b_pr = params["b_pr"].astype(f32)
    w_tg = params["w_tg"].astype(bf16)
    b_tg = params["b_tg"].astype(f32)

    h_on, d_on = w_pr.shape
    h_tg = w_tg.shape[1]

    grid = (n_pad // tile_m,)

    def full(shape):
        return pl.BlockSpec(shape, lambda i: tuple(0 for _ in shape))

    in_specs = [
        pl.BlockSpec((1, tile_m), lambda i: (0, i)),        # gid, lane-tiled
        pl.BlockSpec((tile_m, n_pad), lambda i: (i, 0)),    # A2 row slab
        full(x2_p.shape), full(w_tg.shape), full(b_tg.shape),
        full(a1_tail.shape), full(x1_p.shape),
        full(w_on.shape), full(b_on.shape),
        full(w_pr.shape), full(b_pr.shape),
    ]
    out_shape = (
        jax.ShapeDtypeStruct((batch_size, d_on), f32),      # h_n_1
        jax.ShapeDtypeStruct((batch_size, h_tg), f32),      # node_emb_2[:B, :]
        jax.ShapeDtypeStruct((g_pad, h_tg), f32),           # h_sub_2 (padded G)
    )
    out_specs = (
        full((batch_size, d_on)),
        full((batch_size, h_tg)),
        full((g_pad, h_tg)),
    )
    scratch_shapes = [
        pltpu.VMEM((n_pad, h_tg), bf16),    # xw2 = X2 @ W_tg (computed once)
        pltpu.VMEM((g_pad, h_tg), f32),     # segment-sum accumulator
        pltpu.VMEM((g_pad, 1), f32),        # segment-count accumulator
    ]

    kernel = make_bourne_kernel(batch_size=batch_size, g_pad=g_pad, tile_m=tile_m)

    h_n1, emb2_head, h_sub2 = pl.pallas_call(
        kernel,
        out_shape=out_shape,
        grid=grid,
        in_specs=in_specs,
        out_specs=out_specs,
        scratch_shapes=scratch_shapes,
        # The row-tile axis carries the segment-sum reduction -> "arbitrary".
        compiler_params=pltpu.CompilerParams(dimension_semantics=("arbitrary",)),
    )(gid, a2_p, x2_p, w_tg, b_tg, a1_tail, x1_p, w_on, b_on, w_pr, b_pr)

    return h_n1, emb2_head, h_sub2[:num_groups]


# ----------------------------------------------------------------------------
# Deterministic setup helpers + pure-JAX reference
# ----------------------------------------------------------------------------
def normalized_adjacency(edge_index, num_nodes):
    """D^{-1/2} (A + I) D^{-1/2} from an undirected edge_index (2, E)."""
    a = jnp.zeros((num_nodes, num_nodes), jnp.float32)
    a = a.at[edge_index[0], edge_index[1]].set(1.0)
    a = a.at[edge_index[1], edge_index[0]].set(1.0)
    a = a + jnp.eye(num_nodes, dtype=jnp.float32)
    d_inv_sqrt = 1.0 / jnp.sqrt(jnp.sum(a, axis=1))
    return a * d_inv_sqrt[:, None] * d_inv_sqrt[None, :]


def init_params(key, feat_in, hidden_on, d_on, hidden_tg):
    k = jax.random.split(key, 4)
    scale = lambda fi, fo: (6.0 / (fi + fo)) ** 0.5  # xavier-uniform-ish
    return {
        "w_on": jax.random.uniform(k[0], (feat_in, hidden_on), jnp.float32,
                                   -scale(feat_in, hidden_on), scale(feat_in, hidden_on)),
        "b_on": jnp.zeros((1, hidden_on), jnp.float32),
        "w_pr": jax.random.uniform(k[1], (hidden_on, d_on), jnp.float32,
                                   -scale(hidden_on, d_on), scale(hidden_on, d_on)),
        "b_pr": jnp.zeros((1, d_on), jnp.float32),
        "w_tg": jax.random.uniform(k[2], (feat_in, hidden_tg), jnp.float32,
                                   -scale(feat_in, hidden_tg), scale(feat_in, hidden_tg)),
        "b_tg": jnp.zeros((1, hidden_tg), jnp.float32),
    }


def reference_forward(a1, x1, a2, x2, batch2, params, *, batch_size, num_groups):
    """Full-precision pure-JAX reference with the module's exact semantics."""
    n = x1.shape[0]
    e1 = jnp.maximum(a1 @ x1 @ params["w_on"] + params["b_on"], 0.0)
    p1 = e1 @ params["w_pr"] + params["b_pr"]
    h_n1 = p1[n - batch_size:, :]

    e2 = jnp.maximum(a2 @ x2 @ params["w_tg"] + params["b_tg"], 0.0)
    emb2_head = e2[:batch_size, :]
    seq2 = e2[: n - batch_size, :]
    m2 = (batch2[None, :] == jnp.arange(num_groups)[:, None]).astype(jnp.float32)
    seg_sum = m2 @ seq2
    cnt = jnp.sum(m2, axis=1, keepdims=True)
    h_sub2 = seg_sum / (cnt + 1.0)   # scatter_reduce_('mean', include_self=True) on zeros
    return h_n1, emb2_head, h_sub2


# ----------------------------------------------------------------------------
if __name__ == "__main__":
    # 256 nodes per view; the last 32 rows are the anchor ("batch") nodes, the
    # first 224 context nodes belong to 8 subgraphs of 28 nodes each.
    NUM_NODES = 256
    BATCH_SIZE = 32
    NUM_GROUPS = 8
    FEAT_IN = 256
    HIDDEN_ON = 128         # encoder_h.out_dim
    D_ON = 128              # predictor output dim
    HIDDEN_TG = 128         # encoder_g.out_dim

    key = jax.random.PRNGKey(0)
    kx1, kx2, kp = jax.random.split(key, 3)

    x1 = jax.random.normal(kx1, (NUM_NODES, FEAT_IN), jnp.float32) * 0.1
    x2 = jax.random.normal(kx2, (NUM_NODES, FEAT_IN), jnp.float32) * 0.1

    # deterministic ring graphs for both views
    src = jnp.arange(NUM_NODES, dtype=jnp.int32)
    edge_index_1 = jnp.stack([src, (src + 1) % NUM_NODES])
    edge_index_2 = jnp.stack([src, (src + 2) % NUM_NODES])
    a1 = normalized_adjacency(edge_index_1, NUM_NODES)
    a2 = normalized_adjacency(edge_index_2, NUM_NODES)

    # data2.batch: subgraph id for each of the (NUM_NODES - BATCH_SIZE) context nodes
    n_sub = NUM_NODES - BATCH_SIZE
    batch2 = jnp.arange(n_sub, dtype=jnp.int32) // (n_sub // NUM_GROUPS)

    params = init_params(kp, FEAT_IN, HIDDEN_ON, D_ON, HIDDEN_TG)

    run = functools.partial(bourne_forward,
                            batch_size=BATCH_SIZE, num_groups=NUM_GROUPS,
                            tile_m=128)
    h_n1, emb2_head, h_sub2 = jax.jit(run)(a1, x1, a2, x2, batch2, params)
    jax.block_until_ready((h_n1, emb2_head, h_sub2))

    # sanity check vs. full-precision pure-JAX reference (kernel runs in bf16)
    r_n1, r_head, r_sub2 = reference_forward(a1, x1, a2, x2, batch2, params,
                                             batch_size=BATCH_SIZE,
                                             num_groups=NUM_GROUPS)
    assert h_n1.shape == (BATCH_SIZE, D_ON)
    assert emb2_head.shape == (BATCH_SIZE, HIDDEN_TG)
    assert h_sub2.shape == (NUM_GROUPS, HIDDEN_TG)
    assert jnp.allclose(h_n1, r_n1, atol=1e-2, rtol=1e-2)
    assert jnp.allclose(emb2_head, r_head, atol=1e-2, rtol=1e-2)
    assert jnp.allclose(h_sub2, r_sub2, atol=1e-2, rtol=1e-2)

    print("KERNEL_OK")
</pallas_src>

<mosaic_0001>
module attributes {stable_mosaic.version = 11 : i64} {
  func.func @kernel(%arg0: i32, %arg1: memref<1x128xi32, #tpu.memory_space<vmem>>, %arg2: memref<128x256xbf16, #tpu.memory_space<vmem>>, %arg3: memref<256x256xbf16, #tpu.memory_space<vmem>>, %arg4: memref<256x128xbf16, #tpu.memory_space<vmem>>, %arg5: memref<1x128xf32, #tpu.memory_space<vmem>>, %arg6: memref<32x256xbf16, #tpu.memory_space<vmem>>, %arg7: memref<256x256xbf16, #tpu.memory_space<vmem>>, %arg8: memref<256x128xbf16, #tpu.memory_space<vmem>>, %arg9: memref<1x128xf32, #tpu.memory_space<vmem>>, %arg10: memref<128x128xbf16, #tpu.memory_space<vmem>>, %arg11: memref<1x128xf32, #tpu.memory_space<vmem>>, %arg12: memref<32x128xf32, #tpu.memory_space<vmem>>, %arg13: memref<32x128xf32, #tpu.memory_space<vmem>>, %arg14: memref<8x128xf32, #tpu.memory_space<vmem>>, %arg15: memref<256x128xbf16, #tpu.memory_space<vmem>>, %arg16: memref<8x128xf32, #tpu.memory_space<vmem>>, %arg17: memref<8x1xf32, #tpu.memory_space<vmem>>) attributes {dimension_semantics = [#tpu.dimension_semantics<arbitrary>], iteration_bounds = array<i64: 2>, scalar_prefetch = 0 : i64, scratch_operands = 3 : i64, tpu.core_type = #tpu.core_type<tc>, window_params = [{transform_indices = @transform_0, window_bounds = array<i64: 1, 128>}, {transform_indices = @transform_1, window_bounds = array<i64: 128, 256>}, {pipeline_mode = #tpu.pipeline_mode<synchronous>, transform_indices = @transform_2, window_bounds = array<i64: 256, 256>}, {pipeline_mode = #tpu.pipeline_mode<synchronous>, transform_indices = @transform_3, window_bounds = array<i64: 256, 128>}, {pipeline_mode = #tpu.pipeline_mode<synchronous>, transform_indices = @transform_4, window_bounds = array<i64: 1, 128>}, {pipeline_mode = #tpu.pipeline_mode<synchronous>, transform_indices = @transform_5, window_bounds = array<i64: 32, 256>}, {pipeline_mode = #tpu.pipeline_mode<synchronous>, transform_indices = @transform_6, window_bounds = array<i64: 256, 256>}, {pipeline_mode = #tpu.pipeline_mode<synchronous>, transform_indices = @transform_7, window_bounds = array<i64: 256, 128>}, {pipeline_mode = #tpu.pipeline_mode<synchronous>, transform_indices = @transform_8, window_bounds = array<i64: 1, 128>}, {pipeline_mode = #tpu.pipeline_mode<synchronous>, transform_indices = @transform_9, window_bounds = array<i64: 128, 128>}, {pipeline_mode = #tpu.pipeline_mode<synchronous>, transform_indices = @transform_10, window_bounds = array<i64: 1, 128>}, {pipeline_mode = #tpu.pipeline_mode<synchronous>, transform_indices = @transform_11, window_bounds = array<i64: 32, 128>}, {pipeline_mode = #tpu.pipeline_mode<synchronous>, transform_indices = @transform_12, window_bounds = array<i64: 32, 128>}, {pipeline_mode = #tpu.pipeline_mode<synchronous>, transform_indices = @transform_13, window_bounds = array<i64: 8, 128>}]} {
    %c0_i32 = arith.constant 0 : i32
    %0 = arith.cmpi eq, %arg0, %c0_i32 : i32
    %1 = arith.extui %0 : i1 to i32
    %c0_i32_0 = arith.constant 0 : i32
    %2 = arith.cmpi ne, %1, %c0_i32_0 : i32
    scf.if %2 {
      %c0_24 = arith.constant 0 : index
      %c0_25 = arith.constant 0 : index
      %35 = vector.load %arg3[%c0_24, %c0_25] : memref<256x256xbf16, #tpu.memory_space<vmem>>, vector<256x256xbf16>
      %c0_26 = arith.constant 0 : index
      %c0_27 = arith.constant 0 : index
      %36 = vector.load %arg4[%c0_26, %c0_27] : memref<256x128xbf16, #tpu.memory_space<vmem>>, vector<256x128xbf16>
      %cst_28 = arith.constant dense<0.000000e+00> : vector<256x128xf32>
      %37 = tpu.matmul %35, %36, %cst_28 {dimension_numbers = #tpu.dot_dimension_numbers<[1], [0], [0], [1], [0, 0, 1, 1], [], []>} : vector<256x256xbf16>, vector<256x128xbf16>, vector<256x128xf32> -> vector<256x128xf32>
      %38 = arith.truncf %37 : vector<256x128xf32> to vector<256x128xbf16>
      %c0_29 = arith.constant 0 : index
      %c0_30 = arith.constant 0 : index
      %39 = vector.load %arg15[%c0_29, %c0_30] : memref<256x128xbf16, #tpu.memory_space<vmem>>, vector<256x128xbf16>
      tpu.vector_store %arg15[%c0_29, %c0_30], %38 {strides = array<i32>} : memref<256x128xbf16, #tpu.memory_space<vmem>>, vector<256x128xbf16>,
      %cst_31 = arith.constant 0.000000e+00 : f32
      %40 = vector.broadcast %cst_31 : f32 to vector<8x128xf32>
      %c0_32 = arith.constant 0 : index
      %c0_33 = arith.constant 0 : index
      %41 = vector.load %arg16[%c0_32, %c0_33] : memref<8x128xf32, #tpu.memory_space<vmem>>, vector<8x128xf32>
      tpu.vector_store %arg16[%c0_32, %c0_33], %40 {strides = array<i32>} : memref<8x128xf32, #tpu.memory_space<vmem>>, vector<8x128xf32>,
      %cst_34 = arith.constant 0.000000e+00 : f32
      %42 = vector.broadcast %cst_34 : f32 to vector<8x1xf32>
      %c0_35 = arith.constant 0 : index
      %c0_36 = arith.constant 0 : index
      %43 = vector.load %arg17[%c0_35, %c0_36] : memref<8x1xf32, #tpu.memory_space<vmem>>, vector<8x1xf32>
      tpu.vector_store %arg17[%c0_35, %c0_36], %42 {strides = array<i32>} : memref<8x1xf32, #tpu.memory_space<vmem>>, vector<8x1xf32>,
      %c0_37 = arith.constant 0 : index
      %c0_38 = arith.constant 0 : index
      %44 = vector.load %arg6[%c0_37, %c0_38] : memref<32x256xbf16, #tpu.memory_space<vmem>>, vector<32x256xbf16>
      %c0_39 = arith.constant 0 : index
      %c0_40 = arith.constant 0 : index
      %45 = vector.load %arg7[%c0_39, %c0_40] : memref<256x256xbf16, #tpu.memory_space<vmem>>, vector<256x256xbf16>
      %cst_41 = arith.constant dense<0.000000e+00> : vector<32x256xf32>
      %46 = tpu.matmul %44, %45, %cst_41 {dimension_numbers = #tpu.dot_dimension_numbers<[1], [0], [0], [1], [0, 0, 1, 1], [], []>} : vector<32x256xbf16>, vector<256x256xbf16>, vector<32x256xf32> -> vector<32x256xf32>
      %47 = arith.truncf %46 : vector<32x256xf32> to vector<32x256xbf16>
      %c0_42 = arith.constant 0 : index
      %c0_43 = arith.constant 0 : index
      %48 = vector.load %arg8[%c0_42, %c0_43] : memref<256x128xbf16, #tpu.memory_space<vmem>>, vector<256x128xbf16>
      %cst_44 = arith.constant dense<0.000000e+00> : vector<32x128xf32>
      %49 = tpu.matmul %47, %48, %cst_44 {dimension_numbers = #tpu.dot_dimension_numbers<[1], [0], [0], [1], [0, 0, 1, 1], [], []>} : vector<32x256xbf16>, vector<256x128xbf16>, vector<32x128xf32> -> vector<32x128xf32>
      %c0_45 = arith.constant 0 : index
      %c0_46 = arith.constant 0 : index
      %50 = vector.load %arg9[%c0_45, %c0_46] : memref<1x128xf32, #tpu.memory_space<vmem>>, vector<1x128xf32>
      %51 = vector.broadcast %50 : vector<1x128xf32> to vector<32x128xf32>
      %52 = arith.addf %49, %51 : vector<32x128xf32>
      %cst_47 = arith.constant 0.000000e+00 : f32
      %53 = vector.broadcast %cst_47 : f32 to vector<32x128xf32>
      %54 = arith.maximumf %52, %53 : vector<32x128xf32>
      %55 = arith.truncf %54 : vector<32x128xf32> to vector<32x128xbf16>
      %c0_48 = arith.constant 0 : index
      %c0_49 = arith.constant 0 : index
      %56 = vector.load %arg10[%c0_48, %c0_49] : memref<128x128xbf16, #tpu.memory_space<vmem>>, vector<128x128xbf16>
      %cst_50 = arith.constant dense<0.000000e+00> : vector<32x128xf32>
      %57 = tpu.matmul %55, %56, %cst_50 {dimension_numbers = #tpu.dot_dimension_numbers<[1], [0], [0], [1], [0, 0, 1, 1], [], []>} : vector<32x128xbf16>, vector<128x128xbf16>, vector<32x128xf32> -> vector<32x128xf32>
      %c0_51 = arith.constant 0 : index
      %c0_52 = arith.constant 0 : index
      %58 = vector.load %arg11[%c0_51, %c0_52] : memref<1x128xf32, #tpu.memory_space<vmem>>, vector<1x128xf32>
      %59 = vector.broadcast %58 : vector<1x128xf32> to vector<32x128xf32>
      %60 = arith.addf %57, %59 : vector<32x128xf32>
      %c0_53 = arith.constant 0 : index
      %c0_54 = arith.constant 0 : index
      %61 = vector.load %arg12[%c0_53, %c0_54] : memref<32x128xf32, #tpu.memory_space<vmem>>, vector<32x128xf32>
      tpu.vector_store %arg12[%c0_53, %c0_54], %60 {strides = array<i32>} : memref<32x128xf32, #tpu.memory_space<vmem>>, vector<32x128xf32>,
    } else {
    }
    %c0 = arith.constant 0 : index
    %c0_1 = arith.constant 0 : index
    %3 = vector.load %arg2[%c0, %c0_1] : memref<128x256xbf16, #tpu.memory_space<vmem>>, vector<128x256xbf16>
    %c0_2 = arith.constant 0 : index
    %c0_3 = arith.constant 0 : index
    %4 = vector.load %arg15[%c0_2, %c0_3] : memref<256x128xbf16, #tpu.memory_space<vmem>>, vector<256x128xbf16>
    %cst = arith.constant dense<0.000000e+00> : vector<128x128xf32>
    %5 = tpu.matmul %3, %4, %cst {dimension_numbers = #tpu.dot_dimension_numbers<[1], [0], [0], [1], [0, 0, 1, 1], [], []>} : vector<128x256xbf16>, vector<256x128xbf16>, vector<128x128xf32> -> vector<128x128xf32>
    %c0_4 = arith.constant 0 : index
    %c0_5 = arith.constant 0 : index
    %6 = vector.load %arg5[%c0_4, %c0_5] : memref<1x128xf32, #tpu.memory_space<vmem>>, vector<1x128xf32>
    %7 = vector.broadcast %6 : vector<1x128xf32> to vector<128x128xf32>
    %8 = arith.addf %5, %7 : vector<128x128xf32>
    %cst_6 = arith.constant 0.000000e+00 : f32
    %9 = vector.broadcast %cst_6 : f32 to vector<128x128xf32>
    %10 = arith.maximumf %8, %9 : vector<128x128xf32>
    %c0_i32_7 = arith.constant 0 : i32
    %11 = arith.cmpi eq, %arg0, %c0_i32_7 : i32
    %12 = arith.extui %11 : i1 to i32
    %c0_i32_8 = arith.constant 0 : i32
    %13 = arith.cmpi ne, %12, %c0_i32_8 : i32
    scf.if %13 {
      %35 = vector.extract_strided_slice %10 {offsets = [0, 0], sizes = [32, 128], strides = [1, 1]} : vector<128x128xf32> to vector<32x128xf32>
      %c0_24 = arith.constant 0 : index
      %c0_25 = arith.constant 0 : index
      %36 = vector.load %arg13[%c0_24, %c0_25] : memref<32x128xf32, #tpu.memory_space<vmem>>, vector<32x128xf32>
      tpu.vector_store %arg13[%c0_24, %c0_25], %35 {strides = array<i32>} : memref<32x128xf32, #tpu.memory_space<vmem>>, vector<32x128xf32>,
    } else {
    }
    %c0_9 = arith.constant 0 : index
    %c0_10 = arith.constant 0 : index
    %14 = vector.load %arg1[%c0_9, %c0_10] : memref<1x128xi32, #tpu.memory_space<vmem>>, vector<1x128xi32>
    %15 = tpu.iota {dimensions = array<i32: 0>} : vector<8x128xi32>
    %16 = vector.broadcast %14 : vector<1x128xi32> to vector<8x128xi32>
    %17 = arith.cmpi eq, %16, %15 : vector<8x128xi32>
    %cst_11 = arith.constant 1.000000e+00 : f32
    %cst_12 = arith.constant 0.000000e+00 : f32
    %18 = vector.broadcast %cst_11 : f32 to vector<8x128xf32>
    %19 = vector.broadcast %cst_12 : f32 to vector<8x128xf32>
    %20 = arith.select %17, %18, %19 : vector<8x128xi1>, vector<8x128xf32>
    %21 = arith.truncf %20 : vector<8x128xf32> to vector<8x128xbf16>
    %c0_13 = arith.constant 0 : index
    %c0_14 = arith.constant 0 : index
    %22 = vector.load %arg16[%c0_13, %c0_14] : memref<8x128xf32, #tpu.memory_space<vmem>>, vector<8x128xf32>
    %23 = arith.truncf %10 : vector<128x128xf32> to vector<128x128xbf16>
    %cst_15 = arith.constant dense<0.000000e+00> : vector<8x128xf32>
    %24 = tpu.matmul %21, %23, %cst_15 {dimension_numbers = #tpu.dot_dimension_numbers<[1], [0], [0], [1], [0, 0, 1, 1], [], []>} : vector<8x128xbf16>, vector<128x128xbf16>, vector<8x128xf32> -> vector<8x128xf32>
    %25 = arith.addf %22, %24 : vector<8x128xf32>
    %c0_16 = arith.constant 0 : index
    %c0_17 = arith.constant 0 : index
    %26 = vector.load %arg16[%c0_16, %c0_17] : memref<8x128xf32, #tpu.memory_space<vmem>>, vector<8x128xf32>
    tpu.vector_store %arg16[%c0_16, %c0_17], %25 {strides = array<i32>} : memref<8x128xf32, #tpu.memory_space<vmem>>, vector<8x128xf32>,
    %c0_18 = arith.constant 0 : index
    %c0_19 = arith.constant 0 : index
    %27 = vector.load %arg17[%c0_18, %c0_19] : memref<8x1xf32, #tpu.memory_space<vmem>>, vector<8x1xf32>
    %cst_20 = arith.constant dense<0.000000e+00> : vector<8xf32>
    %28 = vector.multi_reduction <add>, %20, %cst_20 [1] : vector<8x128xf32> to vector<8xf32>
    %29 = vector.shape_cast %28 : vector<8xf32> to vector<8x1xf32>
    %30 = arith.addf %27, %29 : vector<8x1xf32>
    %c0_21 = arith.constant 0 : index
    %c0_22 = arith.constant 0 : index
    %31 = vector.load %arg17[%c0_21, %c0_22] : memref<8x1xf32, #tpu.memory_space<vmem>>, vector<8x1xf32>
    tpu.vector_store %arg17[%c0_21, %c0_22], %30 {strides = array<i32>} : memref<8x1xf32, #tpu.memory_space<vmem>>, vector<8x1xf32>,
    %c1_i32 = arith.constant 1 : i32
    %32 = arith.cmpi eq, %arg0, %c1_i32 : i32
    %33 = arith.extui %32 : i1 to i32
    %c0_i32_23 = arith.constant 0 : i32
    %34 = arith.cmpi ne, %33, %c0_i32_23 : i32
    scf.if %34 {
      %c0_24 = arith.constant 0 : index
      %c0_25 = arith.constant 0 : index
      %35 = vector.load %arg17[%c0_24, %c0_25] : memref<8x1xf32, #tpu.memory_space<vmem>>, vector<8x1xf32>
      %cst_26 = arith.constant 1.000000e+00 : f32
      %36 = vector.broadcast %cst_26 : f32 to vector<8x1xf32>
      %37 = arith.addf %35, %36 : vector<8x1xf32>
      %38 = tpu.reciprocal %37 {approx = true} : vector<8x1xf32> -> vector<8x1xf32>
      %c0_27 = arith.constant 0 : index
      %c0_28 = arith.constant 0 : index
      %39 = vector.load %arg16[%c0_27, %c0_28] : memref<8x128xf32, #tpu.memory_space<vmem>>, vector<8x128xf32>
      %40 = vector.broadcast %38 : vector<8x1xf32> to vector<8x128xf32>
      %41 = arith.mulf %39, %40 : vector<8x128xf32>
      %c0_29 = arith.constant 0 : index
      %c0_30 = arith.constant 0 : index
      %42 = vector.load %arg14[%c0_29, %c0_30] : memref<8x128xf32, #tpu.memory_space<vmem>>, vector<8x128xf32>
      tpu.vector_store %arg14[%c0_29, %c0_30], %41 {strides = array<i32>} : memref<8x128xf32, #tpu.memory_space<vmem>>, vector<8x128xf32>,
    } else {
    }
    return
  }
  func.func @transform_0(%arg0: i32) -> (i32, i32) {
    %c0_i32 = arith.constant 0 : i32
    %c0_i32_0 = arith.constant 0 : i32
    return %c0_i32, %arg0 : i32, i32
  }
  func.func @transform_1(%arg0: i32) -> (i32, i32) {
    %c0_i32 = arith.constant 0 : i32
    %c0_i32_0 = arith.constant 0 : i32
    return %arg0, %c0_i32 : i32, i32
  }
  func.func @transform_2(%arg0: i32) -> (i32, i32) {
    %c0_i32 = arith.constant 0 : i32
    %c0_i32_0 = arith.constant 0 : i32
    %c0_i32_1 = arith.constant 0 : i32
    return %c0_i32, %c0_i32_0 : i32, i32
  }
  func.func @transform_3(%arg0: i32) -> (i32, i32) {
    %c0_i32 = arith.constant 0 : i32
    %c0_i32_0 = arith.constant 0 : i32
    %c0_i32_1 = arith.constant 0 : i32
    return %c0_i32, %c0_i32_0 : i32, i32
  }
  func.func @transform_4(%arg0: i32) -> (i32, i32) {
    %c0_i32 = arith.constant 0 : i32
    %c0_i32_0 = arith.constant 0 : i32
    %c0_i32_1 = arith.constant 0 : i32
    return %c0_i32, %c0_i32_0 : i32, i32
  }
  func.func @transform_5(%arg0: i32) -> (i32, i32) {
    %c0_i32 = arith.constant 0 : i32
    %c0_i32_0 = arith.constant 0 : i32
    %c0_i32_1 = arith.constant 0 : i32
    return %c0_i32, %c0_i32_0 : i32, i32
  }
  func.func @transform_6(%arg0: i32) -> (i32, i32) {
    %c0_i32 = arith.constant 0 : i32
    %c0_i32_0 = arith.constant 0 : i32
    %c0_i32_1 = arith.constant 0 : i32
    return %c0_i32, %c0_i32_0 : i32, i32
  }
  func.func @transform_7(%arg0: i32) -> (i32, i32) {
    %c0_i32 = arith.constant 0 : i32
    %c0_i32_0 = arith.constant 0 : i32
    %c0_i32_1 = arith.constant 0 : i32
    return %c0_i32, %c0_i32_0 : i32, i32
  }
  func.func @transform_8(%arg0: i32) -> (i32, i32) {
    %c0_i32 = arith.constant 0 : i32
    %c0_i32_0 = arith.constant 0 : i32
    %c0_i32_1 = arith.constant 0 : i32
    return %c0_i32, %c0_i32_0 : i32, i32
  }
  func.func @transform_9(%arg0: i32) -> (i32, i32) {
    %c0_i32 = arith.constant 0 : i32
    %c0_i32_0 = arith.constant 0 : i32
    %c0_i32_1 = arith.constant 0 : i32
    return %c0_i32, %c0_i32_0 : i32, i32
  }
  func.func @transform_10(%arg0: i32) -> (i32, i32) {
    %c0_i32 = arith.constant 0 : i32
    %c0_i32_0 = arith.constant 0 : i32
    %c0_i32_1 = arith.constant 0 : i32
    return %c0_i32, %c0_i32_0 : i32, i32
  }
  func.func @transform_11(%arg0: i32) -> (i32, i32) {
    %c0_i32 = arith.constant 0 : i32
    %c0_i32_0 = arith.constant 0 : i32
    %c0_i32_1 = arith.constant 0 : i32
    return %c0_i32, %c0_i32_0 : i32, i32
  }
  func.func @transform_12(%arg0: i32) -> (i32, i32) {
    %c0_i32 = arith.constant 0 : i32
    %c0_i32_0 = arith.constant 0 : i32
    %c0_i32_1 = arith.constant 0 : i32
    return %c0_i32, %c0_i32_0 : i32, i32
  }
  func.func @transform_13(%arg0: i32) -> (i32, i32) {
    %c0_i32 = arith.constant 0 : i32
    %c0_i32_0 = arith.constant 0 : i32
    %c0_i32_1 = arith.constant 0 : i32
    return %c0_i32, %c0_i32_0 : i32, i32
  }
}

</mosaic_0001>

<llo_original>
// kernel: bourne_forward.1
$region0: #{bourne_forward.1}
  #allocation0 [shape = 'u32[]', space=smem, size = 0x4, offset = 0x4, fixed_abs, tag = 'smem constant byte address 0x4 - core index']
  #allocation1 [shape = 'u32[144,128]{1,0:T(1,128)}', space=vmem, size = 0x12000, scoped, tag = 'internal scratch']
  #allocation2 [shape = 'bf16[256,128]{1,0:T(16,128)(2,1)}', space=vmem, size = 0x10000, scoped, tag = 'scratch operand']
  #allocation3 [shape = 'f32[8,128]{1,0:T(8,128)}', space=vmem, size = 0x1000, scoped, tag = 'scratch operand']
  #allocation4 [shape = 'f32[8,1]{1,0:T(8,128)}', space=vmem, size = 0x1000, scoped, tag = 'scratch operand']
  %s0 = inlined_call_operand.vmem [shape: s32[1,256], index: 0, kind: input, shape index: {}]
  %s1 = inlined_call_operand.vmem [shape: bf16[256,256], index: 1, kind: input, shape index: {}]
  %s2 = inlined_call_operand.vmem [shape: bf16[256,256], index: 2, kind: input, shape index: {}]
  %s3 = inlined_call_operand.vmem [shape: bf16[256,128], index: 3, kind: input, shape index: {}]
  %s4 = inlined_call_operand.vmem [shape: f32[1,128], index: 4, kind: input, shape index: {}]
  %s5 = inlined_call_operand.vmem [shape: bf16[32,256], index: 5, kind: input, shape index: {}]
  %s6 = inlined_call_operand.vmem [shape: bf16[256,256], index: 6, kind: input, shape index: {}]
  %s7 = inlined_call_operand.vmem [shape: bf16[256,128], index: 7, kind: input, shape index: {}]
  %s8 = inlined_call_operand.vmem [shape: f32[1,128], index: 8, kind: input, shape index: {}]
  %s9 = inlined_call_operand.vmem [shape: bf16[128,128], index: 9, kind: input, shape index: {}]
  %s10 = inlined_call_operand.vmem [shape: f32[1,128], index: 10, kind: input, shape index: {}]
  %s11 = inlined_call_operand.hbm [shape: f32[32,128], index: 11, kind: output, shape index: {0}]
  %s12 = inlined_call_operand.hbm [shape: f32[32,128], index: 12, kind: output, shape index: {1}]
  %s13 = inlined_call_operand.hbm [shape: f32[8,128], index: 13, kind: output, shape index: {2}]
  %14 = xla_tuple %s11, %s12, %s13
  %s15 = sld [smem:[#allocation0]]
  $region105: #{bourne_forward.1} parent=0
    _
  %s17 = ssub.s32 1, %s15
  %s18 = scalar_select 0, %s17, %s15
  $region1: #{bourne_forward.1} parent=0
    #allocation5 [shape = 'u8[16384]{0}', space=vmem, size = 0x4000, scoped, tag = 'output window, operand 0, single buffered']
    #allocation6 [shape = 's32[2]{0}', space=sflag, size = 0x8, scoped, tag = 'scoped memory for bourne_forward.1']
    #allocation7 [shape = 'u8[16384]{0}', space=vmem, size = 0x4000, scoped, tag = 'output window, operand 1, single buffered']
    #allocation8 [shape = 's32[1]{0}', space=sflag, size = 0x4, scoped, tag = 'scoped memory for bourne_forward.1']
    #allocation9 [shape = 'u8[4096]{0}', space=vmem, size = 0x1000, scoped, tag = 'output window, operand 2, single buffered']
    %19 = vsyncpa [#allocation6], 0
    %20 = vsyncpa [#allocation8], 0
    loop: start=0, step=1, limit=4
    $region2: #{bourne_forward.1} parent=1 // loop_pre_header
      _
    $region3: #{bourne_forward.1} parent=1 // loop_header
      %s22 = sphi 0, %s26
      %p23 = scmp.ge.s32.totalorder %s22, 4
      %s32 = sphi 0, %s34
      %s35 = sphi 0, %s32
      %s36 = sphi 0, %s35
      %s52 = sphi 0, %s36
      %s58 = sphi 0, %s60
      %s61 = sphi 0, %s58
      %s62 = sphi 0, %s61
      %s78 = sphi 0, %s62
      %s82 = sphi 0, %s82
      %s84 = sphi 0, %s82
      %s85 = sphi 0, %s84
      %s99 = sphi 0, %s85
      %s103 = sphi 0, %s103
      %s105 = sphi 0, %s103
      %s106 = sphi 0, %s105
      %s120 = sphi 0, %s106
      %s124 = sphi 0, %s124
      %s126 = sphi 0, %s124
      %s127 = sphi 0, %s126
      %s141 = sphi 0, %s127
      %s145 = sphi 0, %s145
      %s147 = sphi 0, %s145
      %s148 = sphi 0, %s147
      %s162 = sphi 0, %s148
      %s166 = sphi 0, %s166
      %s168 = sphi 0, %s166
      %s169 = sphi 0, %s168
      %s183 = sphi 0, %s169
      %s187 = sphi 0, %s187
      %s189 = sphi 0, %s187
      %s190 = sphi 0, %s189
      %s204 = sphi 0, %s190
      %s208 = sphi 0, %s208
      %s210 = sphi 0, %s208
      %s211 = sphi 0, %s210
      %s225 = sphi 0, %s211
      %s229 = sphi 0, %s229
      %s231 = sphi 0, %s229
      %s232 = sphi 0, %s231
      %s246 = sphi 0, %s232
      %s250 = sphi 0, %s250
      %s252 = sphi 0, %s250
      %s253 = sphi 0, %s252
      %s267 = sphi 0, %s253
      %s271 = sphi 0, %s271
      %s273 = sphi 0, %s271
      %s274 = sphi 0, %s273
      %s288 = sphi 0, %s274
      %s292 = sphi 0, %s292
      %s294 = sphi 0, %s292
      %s295 = sphi 0, %s294
      %s309 = sphi 0, %s295
      %s313 = sphi 0, %s313
      %s315 = sphi 0, %s313
      %s316 = sphi 0, %s315
      %s330 = sphi 0, %s316
    $region4: #{bourne_forward.1} parent=1 // loop_header_branch
      %25 = sbr.rel (%p23) target = $region8
    $region5: #{bourne_forward.1} parent=1 // loop_body
      %s27 = ssub.s32 %s22, 1
      %s28 = ssub.s32 %s22, 2
      %s29 = sadd.s32 %s22, 1
      %s30 = ssub.s32 %s22, %s29
      %p31 = scmp.eq.s32.totalorder %s30, 0
      %s33 = sadd.s32 %s32, 1
      %s34 = scalar_select %p31, %s32, %s33
      %p37 = pneg %p31
      %p38 = scmp.eq.s32.totalorder %s22, 1
      %p39 = por %p37, %p38
      %p40 = scmp.ne.s32.totalorder %s32, %s35
      %p41 = scmp.eq.s32.totalorder %s22, 0
      %p42 = por %p40, %p41
      %p43 = scmp.ne.s32.totalorder %s32, %s35
      %p44 = scmp.eq.s32.totalorder %s27, 1
      %p45 = por %p43, %p44
      %p46 = scmp.ne.s32.totalorder %s35, %s36
      %p47 = scmp.eq.s32.totalorder %s27, 0
      %p48 = por %p46, %p47
      %p49 = scmp.ne.s32.totalorder %s35, %s36
      %p50 = scmp.eq.s32.totalorder %s28, 1
      %p51 = por %p49, %p50
      %p53 = scmp.ne.s32.totalorder %s36, %s52
      %p54 = scmp.eq.s32.totalorder %s28, 0
      %p55 = por %p53, %p54
      %s56 = ssub.s32 %s22, %s29
      %p57 = scmp.eq.s32.totalorder %s56, 0
      %s59 = sadd.s32 %s58, 1
      %s60 = scalar_select %p57, %s58, %s59
      %p63 = pneg %p57
      %p64 = scmp.eq.s32.totalorder %s22, 1
      %p65 = por %p63, %p64
      %p66 = scmp.ne.s32.totalorder %s58, %s61
      %p67 = scmp.eq.s32.totalorder %s22, 0
      %p68 = por %p66, %p67
      %p69 = scmp.ne.s32.totalorder %s58, %s61
      %p70 = scmp.eq.s32.totalorder %s27, 1
      %p71 = por %p69, %p70
      %p72 = scmp.ne.s32.totalorder %s61, %s62
      %p73 = scmp.eq.s32.totalorder %s27, 0
      %p74 = por %p72, %p73
      %p75 = scmp.ne.s32.totalorder %s61, %s62
      %p76 = scmp.eq.s32.totalorder %s28, 1
      %p77 = por %p75, %p76
      %p79 = scmp.ne.s32.totalorder %s62, %s78
      %p80 = scmp.eq.s32.totalorder %s28, 0
      %p81 = por %p79, %p80
      %s83 = sadd.s32 %s82, 1
      %p86 = scmp.eq.s32.totalorder %s22, 1
      %p87 = scmp.ne.s32.totalorder %s82, %s84
      %p88 = scmp.eq.s32.totalorder %s22, 0
      %p89 = por %p87, %p88
      %p90 = scmp.ne.s32.totalorder %s82, %s84
      %p91 = scmp.eq.s32.totalorder %s27, 1
      %p92 = por %p90, %p91
      %p93 = scmp.ne.s32.totalorder %s84, %s85
      %p94 = scmp.eq.s32.totalorder %s27, 0
      %p95 = por %p93, %p94
      %p96 = scmp.ne.s32.totalorder %s84, %s85
      %p97 = scmp.eq.s32.totalorder %s28, 1
      %p98 = por %p96, %p97
      %p100 = scmp.ne.s32.totalorder %s85, %s99
      %p101 = scmp.eq.s32.totalorder %s28, 0
      %p102 = por %p100, %p101
      %s104 = sadd.s32 %s103, 1
      %p107 = scmp.eq.s32.totalorder %s22, 1
      %p108 = scmp.ne.s32.totalorder %s103, %s105
      %p109 = scmp.eq.s32.totalorder %s22, 0
      %p110 = por %p108, %p109
      %p111 = scmp.ne.s32.totalorder %s103, %s105
      %p112 = scmp.eq.s32.totalorder %s27, 1
      %p113 = por %p111, %p112
      %p114 = scmp.ne.s32.totalorder %s105, %s106
      %p115 = scmp.eq.s32.totalorder %s27, 0
      %p116 = por %p114, %p115
      %p117 = scmp.ne.s32.totalorder %s105, %s106
      %p118 = scmp.eq.s32.totalorder %s28, 1
      %p119 = por %p117, %p118
      %p121 = scmp.ne.s32.totalorder %s106, %s120
      %p122 = scmp.eq.s32.totalorder %s28, 0
      %p123 = por %p121, %p122
      %s125 = sadd.s32 %s124, 1
      %p128 = scmp.eq.s32.totalorder %s22, 1
      %p129 = scmp.ne.s32.totalorder %s124, %s126
      %p130 = scmp.eq.s32.totalorder %s22, 0
      %p131 = por %p129, %p130
      %p132 = scmp.ne.s32.totalorder %s124, %s126
      %p133 = scmp.eq.s32.totalorder %s27, 1
      %p134 = por %p132, %p133
      %p135 = scmp.ne.s32.totalorder %s126, %s127
      %p136 = scmp.eq.s32.totalorder %s27, 0
      %p137 = por %p135, %p136
      %p138 = scmp.ne.s32.totalorder %s126, %s127
      %p139 = scmp.eq.s32.totalorder %s28, 1
      %p140 = por %p138, %p139
      %p142 = scmp.ne.s32.totalorder %s127, %s141
      %p143 = scmp.eq.s32.totalorder %s28, 0
      %p144 = por %p142, %p143
      %s146 = sadd.s32 %s145, 1
      %p149 = scmp.eq.s32.totalorder %s22, 1
      %p150 = scmp.ne.s32.totalorder %s145, %s147
      %p151 = scmp.eq.s32.totalorder %s22, 0
      %p152 = por %p150, %p151
      %p153 = scmp.ne.s32.totalorder %s145, %s147
      %p154 = scmp.eq.s32.totalorder %s27, 1
      %p155 = por %p153, %p154
      %p156 = scmp.ne.s32.totalorder %s147, %s148
      %p157 = scmp.eq.s32.totalorder %s27, 0
      %p158 = por %p156, %p157
      %p159 = scmp.ne.s32.totalorder %s147, %s148
      %p160 = scmp.eq.s32.totalorder %s28, 1
      %p161 = por %p159, %p160
      %p163 = scmp.ne.s32.totalorder %s148, %s162
      %p164 = scmp.eq.s32.totalorder %s28, 0
      %p165 = por %p163, %p164
      %s167 = sadd.s32 %s166, 1
      %p170 = scmp.eq.s32.totalorder %s22, 1
      %p171 = scmp.ne.s32.totalorder %s166, %s168
      %p172 = scmp.eq.s32.totalorder %s22, 0
      %p173 = por %p171, %p172
      %p174 = scmp.ne.s32.totalorder %s166, %s168
      %p175 = scmp.eq.s32.totalorder %s27, 1
      %p176 = por %p174, %p175
      %p177 = scmp.ne.s32.totalorder %s168, %s169
      %p178 = scmp.eq.s32.totalorder %s27, 0
      %p179 = por %p177, %p178
      %p180 = scmp.ne.s32.totalorder %s168, %s169
      %p181 = scmp.eq.s32.totalorder %s28, 1
      %p182 = por %p180, %p181
      %p184 = scmp.ne.s32.totalorder %s169, %s183
      %p185 = scmp.eq.s32.totalorder %s28, 0
      %p186 = por %p184, %p185
      %s188 = sadd.s32 %s187, 1
      %p191 = scmp.eq.s32.totalorder %s22, 1
      %p192 = scmp.ne.s32.totalorder %s187, %s189
      %p193 = scmp.eq.s32.totalorder %s22, 0
      %p194 = por %p192, %p193
      %p195 = scmp.ne.s32.totalorder %s187, %s189
      %p196 = scmp.eq.s32.totalorder %s27, 1
      %p197 = por %p195, %p196
      %p198 = scmp.ne.s32.totalorder %s189, %s190
      %p199 = scmp.eq.s32.totalorder %s27, 0
      %p200 = por %p198, %p199
      %p201 = scmp.ne.s32.totalorder %s189, %s190
      %p202 = scmp.eq.s32.totalorder %s28, 1
      %p203 = por %p201, %p202
      %p205 = scmp.ne.s32.totalorder %s190, %s204
      %p206 = scmp.eq.s32.totalorder %s28, 0
      %p207 = por %p205, %p206
      %s209 = sadd.s32 %s208, 1
      %p212 = scmp.eq.s32.totalorder %s22, 1
      %p213 = scmp.ne.s32.totalorder %s208, %s210
      %p214 = scmp.eq.s32.totalorder %s22, 0
      %p215 = por %p213, %p214
      %p216 = scmp.ne.s32.totalorder %s208, %s210
      %p217 = scmp.eq.s32.totalorder %s27, 1
      %p218 = por %p216, %p217
      %p219 = scmp.ne.s32.totalorder %s210, %s211
      %p220 = scmp.eq.s32.totalorder %s27, 0
      %p221 = por %p219, %p220
      %p222 = scmp.ne.s32.totalorder %s210, %s211
      %p223 = scmp.eq.s32.totalorder %s28, 1
      %p224 = por %p222, %p223
      %p226 = scmp.ne.s32.totalorder %s211, %s225
      %p227 = scmp.eq.s32.totalorder %s28, 0
      %p228 = por %p226, %p227
      %s230 = sadd.s32 %s229, 1
      %p233 = scmp.eq.s32.totalorder %s22, 1
      %p234 = scmp.ne.s32.totalorder %s229, %s231
      %p235 = scmp.eq.s32.totalorder %s22, 0
      %p236 = por %p234, %p235
      %p237 = scmp.ne.s32.totalorder %s229, %s231
      %p238 = scmp.eq.s32.totalorder %s27, 1
      %p239 = por %p237, %p238
      %p240 = scmp.ne.s32.totalorder %s231, %s232
      %p241 = scmp.eq.s32.totalorder %s27, 0
      %p242 = por %p240, %p241
      %p243 = scmp.ne.s32.totalorder %s231, %s232
      %p244 = scmp.eq.s32.totalorder %s28, 1
      %p245 = por %p243, %p244
      %p247 = scmp.ne.s32.totalorder %s232, %s246
      %p248 = scmp.eq.s32.totalorder %s28, 0
      %p249 = por %p247, %p248
      %s251 = sadd.s32 %s250, 1
      %p254 = scmp.eq.s32.totalorder %s22, 1
      %p255 = scmp.ne.s32.totalorder %s250, %s252
      %p256 = scmp.eq.s32.totalorder %s22, 0
      %p257 = por %p255, %p256
      %p258 = scmp.ne.s32.totalorder %s250, %s252
      %p259 = scmp.eq.s32.totalorder %s27, 1
      %p260 = por %p258, %p259
      %p261 = scmp.ne.s32.totalorder %s252, %s253
      %p262 = scmp.eq.s32.totalorder %s27, 0
      %p263 = por %p261, %p262
      %p264 = scmp.ne.s32.totalorder %s252, %s253
      %p265 = scmp.eq.s32.totalorder %s28, 1
      %p266 = por %p264, %p265
      %p268 = scmp.ne.s32.totalorder %s253, %s267
      %p269 = scmp.eq.s32.totalorder %s28, 0
      %p270 = por %p268, %p269
      %s272 = sadd.s32 %s271, 1
      %p275 = scmp.eq.s32.totalorder %s22, 1
      %p276 = scmp.ne.s32.totalorder %s271, %s273
      %p277 = scmp.eq.s32.totalorder %s22, 0
      %p278 = por %p276, %p277
      %p279 = scmp.ne.s32.totalorder %s271, %s273
      %p280 = scmp.eq.s32.totalorder %s27, 1
      %p281 = por %p279, %p280
      %p282 = scmp.ne.s32.totalorder %s273, %s274
      %p283 = scmp.eq.s32.totalorder %s27, 0
      %p284 = por %p282, %p283
      %p285 = scmp.ne.s32.totalorder %s273, %s274
      %p286 = scmp.eq.s32.totalorder %s28, 1
      %p287 = por %p285, %p286
      %p289 = scmp.ne.s32.totalorder %s274, %s288
      %p290 = scmp.eq.s32.totalorder %s28, 0
      %p291 = por %p289, %p290
      %s293 = sadd.s32 %s292, 1
      %p296 = scmp.eq.s32.totalorder %s22, 1
      %p297 = scmp.ne.s32.totalorder %s292, %s294
      %p298 = scmp.eq.s32.totalorder %s22, 0
      %p299 = por %p297, %p298
      %p300 = scmp.ne.s32.totalorder %s292, %s294
      %p301 = scmp.eq.s32.totalorder %s27, 1
      %p302 = por %p300, %p301
      %p303 = scmp.ne.s32.totalorder %s294, %s295
      %p304 = scmp.eq.s32.totalorder %s27, 0
      %p305 = por %p303, %p304
      %p306 = scmp.ne.s32.totalorder %s294, %s295
      %p307 = scmp.eq.s32.totalorder %s28, 1
      %p308 = por %p306, %p307
      %p310 = scmp.ne.s32.totalorder %s295, %s309
      %p311 = scmp.eq.s32.totalorder %s28, 0
      %p312 = por %p310, %p311
      %s314 = sadd.s32 %s313, 1
      %p317 = scmp.eq.s32.totalorder %s22, 1
      %p318 = scmp.ne.s32.totalorder %s313, %s315
      %p319 = scmp.eq.s32.totalorder %s22, 0
      %p320 = por %p318, %p319
      %p321 = scmp.ne.s32.totalorder %s313, %s315
      %p322 = scmp.eq.s32.totalorder %s27, 1
      %p323 = por %p321, %p322
      %p324 = scmp.ne.s32.totalorder %s315, %s316
      %p325 = scmp.eq.s32.totalorder %s27, 0
      %p326 = por %p324, %p325
      %p327 = scmp.ne.s32.totalorder %s315, %s316
      %p328 = scmp.eq.s32.totalorder %s28, 1
      %p329 = por %p327, %p328
      %p331 = scmp.ne.s32.totalorder %s316, %s330
      %p332 = scmp.eq.s32.totalorder %s28, 0
      %p333 = por %p331, %p332
      %p334 = scmp.le.s32.totalorder 1, %s22
      %p335 = scmp.lt.s32.totalorder %s22, 3
      %p336 = pnand %p334, %p335
      %p337 = pneg %p336
      // Predicated region
      $region9: #{bourne_forward.1} parent=5 // pred_check
        _
      $region10: #{bourne_forward.1} parent=5 // pred_check_branch
        %339 = sbr.rel (%p336) target = $region12
      $region11: #{bourne_forward.1} parent=5 // pred_region
        %s340 = ssub.s32 %s22, 1
        // Predicated region
        $region13: #{bourne_forward.1} parent=11 // pred_check
          %p341 = pneg %p95
        $region14: #{bourne_forward.1} parent=11 // pred_check_branch
          %343 = sbr.rel (%p341) target = $region16
        $region15: #{bourne_forward.1} parent=11 // pred_region
          _
        $region16: #{bourne_forward.1} parent=11 // pred_fallthru
          _
        // Predicated region
        $region17: #{bourne_forward.1} parent=11 // pred_check
          %p344 = pneg %p116
        $region18: #{bourne_forward.1} parent=11 // pred_check_branch
          %346 = sbr.rel (%p344) target = $region20
        $region19: #{bourne_forward.1} parent=11 // pred_region
          _
        $region20: #{bourne_forward.1} parent=11 // pred_fallthru
          _
        // Predicated region
        $region21: #{bourne_forward.1} parent=11 // pred_check
          %p347 = pneg %p137
        $region22: #{bourne_forward.1} parent=11 // pred_check_branch
          %349 = sbr.rel (%p347) target = $region24
        $region23: #{bourne_forward.1} parent=11 // pred_region
          _
        $region24: #{bourne_forward.1} parent=11 // pred_fallthru
          _
        // Predicated region
        $region25: #{bourne_forward.1} parent=11 // pred_check
          %p350 = pneg %p158
        $region26: #{bourne_forward.1} parent=11 // pred_check_branch
          %352 = sbr.rel (%p350) target = $region28
        $region27: #{bourne_forward.1} parent=11 // pred_region
          _
        $region28: #{bourne_forward.1} parent=11 // pred_fallthru
          _
        // Predicated region
        $region29: #{bourne_forward.1} parent=11 // pred_check
          %p353 = pneg %p179
        $region30: #{bourne_forward.1} parent=11 // pred_check_branch
          %355 = sbr.rel (%p353) target = $region32
        $region31: #{bourne_forward.1} parent=11 // pred_region
          _
        $region32: #{bourne_forward.1} parent=11 // pred_fallthru
          _
        // Predicated region
        $region33: #{bourne_forward.1} parent=11 // pred_check
          %p356 = pneg %p200
        $region34: #{bourne_forward.1} parent=11 // pred_check_branch
          %358 = sbr.rel (%p356) target = $region36
        $region35: #{bourne_forward.1} parent=11 // pred_region
          _
        $region36: #{bourne_forward.1} parent=11 // pred_fallthru
          _
        // Predicated region
        $region37: #{bourne_forward.1} parent=11 // pred_check
          %p359 = pneg %p221
        $region38: #{bourne_forward.1} parent=11 // pred_check_branch
          %361 = sbr.rel (%p359) target = $region40
        $region39: #{bourne_forward.1} parent=11 // pred_region
          _
        $region40: #{bourne_forward.1} parent=11 // pred_fallthru
          _
        // Predicated region
        $region41: #{bourne_forward.1} parent=11 // pred_check
          %p362 = pneg %p242
        $region42: #{bourne_forward.1} parent=11 // pred_check_branch
          %364 = sbr.rel (%p362) target = $region44
        $region43: #{bourne_forward.1} parent=11 // pred_region
          _
        $region44: #{bourne_forward.1} parent=11 // pred_fallthru
          _
        // Predicated region
        $region45: #{bourne_forward.1} parent=11 // pred_check
          %p365 = pneg %p263
        $region46: #{bourne_forward.1} parent=11 // pred_check_branch
          %367 = sbr.rel (%p365) target = $region48
        $region47: #{bourne_forward.1} parent=11 // pred_region
          _
        $region48: #{bourne_forward.1} parent=11 // pred_fallthru
          _
      $region12: #{bourne_forward.1} parent=5 // pred_fallthru
        _
      %p368 = scmp.lt.s32.totalorder %s22, 2
      // Predicated region
      $region49: #{bourne_forward.1} parent=5 // pred_check
        %p369 = pneg %p368
      $region50: #{bourne_forward.1} parent=5 // pred_check_branch
        %371 = sbr.rel (%p369) target = $region52
      $region51: #{bourne_forward.1} parent=5 // pred_region
        // Predicated region
        $region53: #{bourne_forward.1} parent=51 // pred_check
          %p372 = pneg %p42
        $region54: #{bourne_forward.1} parent=51 // pred_check_branch
          %374 = sbr.rel (%p372) target = $region56
        $region55: #{bourne_forward.1} parent=51 // pred_region
          %p375 = scmp.lt.s32.totalorder %s22, 1
          %s376 = scalar_select %p375, %s22, 1
          %s377 = scalar_lea.vmem %s0, %s376
        $region56: #{bourne_forward.1} parent=51 // pred_fallthru
          _
        // Predicated region
        $region57: #{bourne_forward.1} parent=51 // pred_check
          %p378 = pneg %p68
        $region58: #{bourne_forward.1} parent=51 // pred_check_branch
          %380 = sbr.rel (%p378) target = $region60
        $region59: #{bourne_forward.1} parent=51 // pred_region
          %s381 = smul.u32 16, %s22
          %p382 = scmp.lt.s32.totalorder %s381, 31
          %s383 = scalar_select %p382, %s381, 31
          %s384 = smul.addr %s383, 2
          %s385 = smul.addr %s384, 4
          %s386 = scalar_lea.vmem %s1, %s385
          %s387 = smul.u32 16, %s22
        $region60: #{bourne_forward.1} parent=51 // pred_fallthru
          _
      $region52: #{bourne_forward.1} parent=5 // pred_fallthru
        _
      %p388 = scmp.le.s32.totalorder 1, %s22
      %p389 = scmp.lt.s32.totalorder %s22, 3
      %p390 = pnand %p388, %p389
      %p391 = pneg %p390
      // Predicated region
      $region61: #{bourne_forward.1} parent=5 // pred_check
        _
      $region62: #{bourne_forward.1} parent=5 // pred_check_branch
        %393 = sbr.rel (%p390) target = $region64
      $region63: #{bourne_forward.1} parent=5 // pred_region
        %s394 = ssub.s32 %s22, 1
        %p395 = scmp.lt.s32.totalorder %s27, 1
        %s396 = scalar_select %p395, %s27, 1
        %s397 = scalar_lea.vmem %s0, %s396
        %p398 = pneg %p48
        %p399 = pneg %p45
        %s400 = smul.u32 16, %s27
        %p401 = scmp.lt.s32.totalorder %s400, 31
        %s402 = scalar_select %p401, %s400, 31
        %s403 = smul.addr %s402, 2
        %s404 = smul.addr %s403, 4
        %s405 = scalar_lea.vmem %s1, %s404
        %p406 = pneg %p74
        %p407 = pneg %p71
        %p408 = pneg %p95
        %p409 = pneg %p92
        %p410 = pneg %p116
        %p411 = pneg %p113
        %p412 = pneg %p137
        %p413 = pneg %p134
        %p414 = pneg %p158
        %p415 = pneg %p155
        %p416 = pneg %p179
        %p417 = pneg %p176
        %p418 = pneg %p200
        %p419 = pneg %p197
        %p420 = pneg %p221
        %p421 = pneg %p218
        %p422 = pneg %p242
        %p423 = pneg %p239
        %p424 = pneg %p263
        %p425 = pneg %p260
        %p426 = pneg %p284
        %p427 = pneg %p281
        %p428 = pneg %p305
        %p429 = pneg %p302
        %p430 = pneg %p326
        %p431 = pneg %p323
        %p432 = scmp.lt.s32.totalorder %s27, 1
        %s433 = scalar_select %p432, %s27, 1
        %s434 = scalar_lea.vmem %s0, %s433
        %s435 = smul.u32 16, %s27
        %p436 = scmp.lt.s32.totalorder %s435, 31
        %s437 = scalar_select %p436, %s435, 31
        %s438 = smul.addr %s437, 2
        %s439 = smul.addr %s438, 4
        %s440 = scalar_lea.vmem %s1, %s439
        %s441 = smul.u32 16, %s27
        %p443 = scmp.eq.s32.totalorder %s27, 0
        // Predicated region
        $region65: #{bourne_forward.1} parent=63 // pred_check
          %p444 = pneg %p443
        $region66: #{bourne_forward.1} parent=63 // pred_check_branch
          %446 = sbr.rel (%p444) target = $region68
        $region67: #{bourne_forward.1} parent=63 // pred_region
          %v447 = vld [vmem:[%s2] sm:$0xff]
          %v448 = vld [vmem:[%s2 + $0x8] sm:$0xff]
          %v449 = vld [vmem:[%s2 + $0x10] sm:$0xff]
          %v450 = vld [vmem:[%s2 + $0x18] sm:$0xff]
          %v451 = vld [vmem:[%s2 + $0x20] sm:$0xff]
          %v452 = vld [vmem:[%s2 + $0x28] sm:$0xff]
          %v453 = vld [vmem:[%s2 + $0x30] sm:$0xff]
          %v454 = vld [vmem:[%s2 + $0x38] sm:$0xff]
          %v455 = vld [vmem:[%s2 + $0x40] sm:$0xff]
          %v456 = vld [vmem:[%s2 + $0x48] sm:$0xff]
          %v457 = vld [vmem:[%s2 + $0x50] sm:$0xff]
          %v458 = vld [vmem:[%s2 + $0x58] sm:$0xff]
          %v459 = vld [vmem:[%s2 + $0x60] sm:$0xff]
          %v460 = vld [vmem:[%s2 + $0x68] sm:$0xff]
          %v461 = vld [vmem:[%s2 + $0x70] sm:$0xff]
          %v462 = vld [vmem:[%s2 + $0x78] sm:$0xff]
          %v463 = vld [vmem:[%s2 + $0x80] sm:$0xff]
          %v464 = vld [vmem:[%s2 + $0x88] sm:$0xff]
          %v465 = vld [vmem:[%s2 + $0x90] sm:$0xff]
          %v466 = vld [vmem:[%s2 + $0x98] sm:$0xff]
          %v467 = vld [vmem:[%s2 + $0xa0] sm:$0xff]
          %v468 = vld [vmem:[%s2 + $0xa8] sm:$0xff]
          %v469 = vld [vmem:[%s2 + $0xb0] sm:$0xff]
          %v470 = vld [vmem:[%s2 + $0xb8] sm:$0xff]
          %v471 = vld [vmem:[%s2 + $0xc0] sm:$0xff]
          %v472 = vld [vmem:[%s2 + $0xc8] sm:$0xff]
          %v473 = vld [vmem:[%s2 + $0xd0] sm:$0xff]
          %v474 = vld [vmem:[%s2 + $0xd8] sm:$0xff]
          %v475 = vld [vmem:[%s2 + $0xe0] sm:$0xff]
          %v476 = vld [vmem:[%s2 + $0xe8] sm:$0xff]
          %v477 = vld [vmem:[%s2 + $0xf0] sm:$0xff]
          %v478 = vld [vmem:[%s2 + $0xf8] sm:$0xff]
          %v479 = vld [vmem:[%s3] sm:$0xf]
          %v480 = vld [vmem:[%s3 + $0x4] sm:$0xf]
          %v481 = vld [vmem:[%s3 + $0x8] sm:$0xf]
          %v482 = vld [vmem:[%s3 + $0xc] sm:$0xf]
          %v483 = vld [vmem:[%s3 + $0x10] sm:$0xf]
          %v484 = vld [vmem:[%s3 + $0x14] sm:$0xf]
          %v485 = vld [vmem:[%s3 + $0x18] sm:$0xf]
          %v486 = vld [vmem:[%s3 + $0x1c] sm:$0xf]
          %v487 = vld [vmem:[%s3 + $0x20] sm:$0xf]
          %v488 = vld [vmem:[%s3 + $0x24] sm:$0xf]
          %v489 = vld [vmem:[%s3 + $0x28] sm:$0xf]
          %v490 = vld [vmem:[%s3 + $0x2c] sm:$0xf]
          %v491 = vld [vmem:[%s3 + $0x30] sm:$0xf]
          %v492 = vld [vmem:[%s3 + $0x34] sm:$0xf]
          %v493 = vld [vmem:[%s3 + $0x38] sm:$0xf]
          %v494 = vld [vmem:[%s3 + $0x3c] sm:$0xf]
          %v495 = vld [vmem:[%s3 + $0x40] sm:$0xf]
          %v496 = vld [vmem:[%s3 + $0x44] sm:$0xf]
          %v497 = vld [vmem:[%s3 + $0x48] sm:$0xf]
          %v498 = vld [vmem:[%s3 + $0x4c] sm:$0xf]
          %v499 = vld [vmem:[%s3 + $0x50] sm:$0xf]
          %v500 = vld [vmem:[%s3 + $0x54] sm:$0xf]
          %v501 = vld [vmem:[%s3 + $0x58] sm:$0xf]
          %v502 = vld [vmem:[%s3 + $0x5c] sm:$0xf]
          %v503 = vld [vmem:[%s3 + $0x60] sm:$0xf]
          %v504 = vld [vmem:[%s3 + $0x64] sm:$0xf]
          %v505 = vld [vmem:[%s3 + $0x68] sm:$0xf]
          %v506 = vld [vmem:[%s3 + $0x6c] sm:$0xf]
          %v507 = vld [vmem:[%s3 + $0x70] sm:$0xf]
          %v508 = vld [vmem:[%s3 + $0x74] sm:$0xf]
          %v509 = vld [vmem:[%s3 + $0x78] sm:$0xf]
          %v510 = vld [vmem:[%s3 + $0x7c] sm:$0xf]
          %v543 = vunpack.c.l.b16 %v447
          %v544 = vunpack.c.h.b16 %v447
          %v545 = vunpack.c.l.b16 %v448
          %v546 = vunpack.c.h.b16 %v448
          %v547 = vunpack.c.l.b16 %v449
          %v548 = vunpack.c.h.b16 %v449
          %v549 = vunpack.c.l.b16 %v450
          %v550 = vunpack.c.h.b16 %v450
          %v551 = vunpack.c.l.b16 %v451
          %v552 = vunpack.c.h.b16 %v451
          %v553 = vunpack.c.l.b16 %v452
          %v554 = vunpack.c.h.b16 %v452
          %v555 = vunpack.c.l.b16 %v453
          %v556 = vunpack.c.h.b16 %v453
          %v557 = vunpack.c.l.b16 %v454
          %v558 = vunpack.c.h.b16 %v454
          %v559 = vunpack.c.l.b16 %v455
          %v560 = vunpack.c.h.b16 %v455
          %v561 = vunpack.c.l.b16 %v456
          %v562 = vunpack.c.h.b16 %v456
          %v563 = vunpack.c.l.b16 %v457
          %v564 = vunpack.c.h.b16 %v457
          %v565 = vunpack.c.l.b16 %v458
          %v566 = vunpack.c.h.b16 %v458
          %v567 = vunpack.c.l.b16 %v459
          %v568 = vunpack.c.h.b16 %v459
          %v569 = vunpack.c.l.b16 %v460
          %v570 = vunpack.c.h.b16 %v460
          %v571 = vunpack.c.l.b16 %v461
          %v572 = vunpack.c.h.b16 %v461
          %v573 = vunpack.c.l.b16 %v462
          %v574 = vunpack.c.h.b16 %v462
          %v575 = vunpack.c.l.b16 %v463
          %v576 = vunpack.c.h.b16 %v463
          %v577 = vunpack.c.l.b16 %v464
          %v578 = vunpack.c.h.b16 %v464
          %v579 = vunpack.c.l.b16 %v465
          %v580 = vunpack.c.h.b16 %v465
          %v581 = vunpack.c.l.b16 %v466
          %v582 = vunpack.c.h.b16 %v466
          %v583 = vunpack.c.l.b16 %v467
          %v584 = vunpack.c.h.b16 %v467
          %v585 = vunpack.c.l.b16 %v468
          %v586 = vunpack.c.h.b16 %v468
          %v587 = vunpack.c.l.b16 %v469
          %v588 = vunpack.c.h.b16 %v469
          %v589 = vunpack.c.l.b16 %v470
          %v590 = vunpack.c.h.b16 %v470
          %v591 = vunpack.c.l.b16 %v471
          %v592 = vunpack.c.h.b16 %v471
          %v593 = vunpack.c.l.b16 %v472
          %v594 = vunpack.c.h.b16 %v472
          %v595 = vunpack.c.l.b16 %v473
          %v596 = vunpack.c.h.b16 %v473
          %v597 = vunpack.c.l.b16 %v474
          %v598 = vunpack.c.h.b16 %v474
          %v599 = vunpack.c.l.b16 %v475
          %v600 = vunpack.c.h.b16 %v475
          %v601 = vunpack.c.l.b16 %v476
          %v602 = vunpack.c.h.b16 %v476
          %v603 = vunpack.c.l.b16 %v477
          %v604 = vunpack.c.h.b16 %v477
          %v605 = vunpack.c.l.b16 %v478
          %v606 = vunpack.c.h.b16 %v478
          %v607 = vpack.c.b16 %v545, %v543
          %v608 = vpack.c.b16 %v546, %v544
          %v609 = vpack.c.b16 %v549, %v547
          %v610 = vpack.c.b16 %v550, %v548
          %v611 = vpack.c.b16 %v553, %v551
          %v612 = vpack.c.b16 %v554, %v552
          %v613 = vpack.c.b16 %v557, %v555
          %v614 = vpack.c.b16 %v558, %v556
          %v615 = vpack.c.b16 %v561, %v559
          %v616 = vpack.c.b16 %v562, %v560
          %v617 = vpack.c.b16 %v565, %v563
          %v618 = vpack.c.b16 %v566, %v564
          %v619 = vpack.c.b16 %v569, %v567
          %v620 = vpack.c.b16 %v570, %v568
          %v621 = vpack.c.b16 %v573, %v571
          %v622 = vpack.c.b16 %v574, %v572
          %v623 = vpack.c.b16 %v577, %v575
          %v624 = vpack.c.b16 %v578, %v576
          %v625 = vpack.c.b16 %v581, %v579
          %v626 = vpack.c.b16 %v582, %v580
          %v627 = vpack.c.b16 %v585, %v583
          %v628 = vpack.c.b16 %v586, %v584
          %v629 = vpack.c.b16 %v589, %v587
          %v630 = vpack.c.b16 %v590, %v588
          %v631 = vpack.c.b16 %v593, %v591
          %v632 = vpack.c.b16 %v594, %v592
          %v633 = vpack.c.b16 %v597, %v595
          %v634 = vpack.c.b16 %v598, %v596
          %v635 = vpack.c.b16 %v601, %v599
          %v636 = vpack.c.b16 %v602, %v600
          %v637 = vpack.c.b16 %v605, %v603
          %v638 = vpack.c.b16 %v606, %v604
          %v703 = vunpack.c.l.b16 %v479
          %v704 = vunpack.c.l.b16 %v480
          %v705 = vunpack.c.l.b16 %v481
          %v706 = vunpack.c.l.b16 %v482
          %v707 = vunpack.c.l.b16 %v483
          %v708 = vunpack.c.l.b16 %v484
          %v709 = vunpack.c.l.b16 %v485
          %v710 = vunpack.c.l.b16 %v486
          %v711 = vunpack.c.l.b16 %v487
          %v712 = vunpack.c.l.b16 %v488
          %v713 = vunpack.c.l.b16 %v489
          %v714 = vunpack.c.l.b16 %v490
          %v715 = vunpack.c.l.b16 %v491
          %v716 = vunpack.c.l.b16 %v492
          %v717 = vunpack.c.l.b16 %v493
          %v718 = vunpack.c.l.b16 %v494
          %v719 = vunpack.c.l.b16 %v495
          %v720 = vunpack.c.l.b16 %v496
          %v721 = vunpack.c.l.b16 %v497
          %v722 = vunpack.c.l.b16 %v498
          %v723 = vunpack.c.l.b16 %v499
          %v724 = vunpack.c.l.b16 %v500
          %v725 = vunpack.c.l.b16 %v501
          %v726 = vunpack.c.l.b16 %v502
          %v727 = vunpack.c.l.b16 %v503
          %v728 = vunpack.c.l.b16 %v504
          %v729 = vunpack.c.l.b16 %v505
          %v730 = vunpack.c.l.b16 %v506
          %v731 = vunpack.c.l.b16 %v507
          %v732 = vunpack.c.l.b16 %v508
          %v733 = vunpack.c.l.b16 %v509
          %v734 = vunpack.c.l.b16 %v510
          %v735 = vpack.c.b16 %v704, %v703
          %v736 = vpack.c.b16 %v706, %v705
          %v737 = vpack.c.b16 %v708, %v707
          %v738 = vpack.c.b16 %v710, %v709
          %v739 = vpack.c.b16 %v712, %v711
          %v740 = vpack.c.b16 %v714, %v713
          %v741 = vpack.c.b16 %v716, %v715
          %v742 = vpack.c.b16 %v718, %v717
          %v743 = vpack.c.b16 %v720, %v719
          %v744 = vpack.c.b16 %v722, %v721
          %v745 = vpack.c.b16 %v724, %v723
          %v746 = vpack.c.b16 %v726, %v725
          %v747 = vpack.c.b16 %v728, %v727
          %v748 = vpack.c.b16 %v730, %v729
          %v749 = vpack.c.b16 %v732, %v731
          %v750 = vpack.c.b16 %v734, %v733
          %767 = vmatprep.subr.bf16.mxu0 0
          %768 = vmatpush1.bf16.msra.mxu0 %v735
          %769 = vmatprep.subr.bf16.mxu0 0
          %770 = vmatpush1.bf16.msra.mxu0 %v736
          %771 = vmatprep.subr.bf16.mxu0 0
          %772 = vmatpush1.bf16.msra.mxu0 %v737
          %773 = vmatprep.subr.bf16.mxu0 0
          %774 = vmatpush1.bf16.msra.mxu0 %v738
          %775 = vmatprep.subr.bf16.mxu0 0
          %776 = vmatpush1.bf16.msra.mxu0 %v739
          %777 = vmatprep.subr.bf16.mxu0 0
          %778 = vmatpush1.bf16.msra.mxu0 %v740
          %779 = vmatprep.subr.bf16.mxu0 0
          %780 = vmatpush1.bf16.msra.mxu0 %v741
          %781 = vmatprep.subr.bf16.mxu0 0
          %782 = vmatpush1.bf16.msra.mxu0 %v742
          %783 = vmatprep.subr.bf16.mxu0 0
          %784 = vmatpush1.bf16.msra.mxu0 %v743
          %785 = vmatprep.subr.bf16.mxu0 0
          %786 = vmatpush1.bf16.msra.mxu0 %v744
          %787 = vmatprep.subr.bf16.mxu0 0
          %788 = vmatpush1.bf16.msra.mxu0 %v745
          %789 = vmatprep.subr.bf16.mxu0 0
          %790 = vmatpush1.bf16.msra.mxu0 %v746
          %791 = vmatprep.subr.bf16.mxu0 0
          %792 = vmatpush1.bf16.msra.mxu0 %v747
          %793 = vmatprep.subr.bf16.mxu0 0
          %794 = vmatpush1.bf16.msra.mxu0 %v748
          %795 = vmatprep.subr.bf16.mxu0 0
          %796 = vmatpush1.bf16.msra.mxu0 %v749
          %797 = vmatprep.subr.bf16.mxu0 0
          %798 = vmatpush1.bf16.msra.mxu0 %v750
          %799 = vmatprep.mubr.bf16.mxu0 %v608
          %800 = vmatmul.mubr.bf16.gmra.mrb[0].mxu0 %v607
          %v801 = vpop.f32.mrb[0].mxu0
          %v802 = vadd.f32 0.0, %v801
          %v803 = vpop.f32.mrb[0].mxu0
          %v804 = vpop.f32.mrb[0].mxu0
          %v805 = vadd.f32 0.0, %v804
          %v806 = vpop.f32.mrb[0].mxu0
          %807 = vmatprep.mubr.bf16.mxu0 %v610
          %808 = vmatmul.mubr.bf16.gmra.mrb[0].mxu0 %v609
          %v809 = vpop.f32.mrb[0].mxu0
          %v810 = vadd.f32 0.0, %v809
          %v811 = vpop.f32.mrb[0].mxu0
          %v812 = vpop.f32.mrb[0].mxu0
          %v813 = vadd.f32 0.0, %v812
          %v814 = vpop.f32.mrb[0].mxu0
          %815 = vmatprep.mubr.bf16.mxu0 %v612
          %816 = vmatmul.mubr.bf16.gmra.mrb[0].mxu0 %v611
          %v817 = vpop.f32.mrb[0].mxu0
          %v818 = vadd.f32 0.0, %v817
          %v819 = vpop.f32.mrb[0].mxu0
          %v820 = vpop.f32.mrb[0].mxu0
          %v821 = vadd.f32 0.0, %v820
          %v822 = vpop.f32.mrb[0].mxu0
          %823 = vmatprep.mubr.bf16.mxu0 %v614
          %824 = vmatmul.mubr.bf16.gmra.mrb[0].mxu0 %v613
          %v825 = vpop.f32.mrb[0].mxu0
          %v826 = vadd.f32 0.0, %v825
          %v827 = vpop.f32.mrb[0].mxu0
          %v828 = vpop.f32.mrb[0].mxu0
          %v829 = vadd.f32 0.0, %v828
          %v830 = vpop.f32.mrb[0].mxu0
          %831 = vmatprep.mubr.bf16.mxu0 %v616
          %832 = vmatmul.mubr.bf16.gmra.mrb[0].mxu0 %v615
          %v833 = vpop.f32.mrb[0].mxu0
          %v834 = vadd.f32 0.0, %v833
          %v835 = vpop.f32.mrb[0].mxu0
          %v836 = vpop.f32.mrb[0].mxu0
          %v837 = vadd.f32 0.0, %v836
          %v838 = vpop.f32.mrb[0].mxu0
          %839 = vmatprep.mubr.bf16.mxu0 %v618
          %840 = vmatmul.mubr.bf16.gmra.mrb[0].mxu0 %v617
          %v841 = vpop.f32.mrb[0].mxu0
          %v842 = vadd.f32 0.0, %v841
          %v843 = vpop.f32.mrb[0].mxu0
          %v844 = vpop.f32.mrb[0].mxu0
          %v845 = vadd.f32 0.0, %v844
          %v846 = vpop.f32.mrb[0].mxu0
          %847 = vmatprep.mubr.bf16.mxu0 %v620
          %848 = vmatmul.mubr.bf16.gmra.mrb[0].mxu0 %v619
          %v849 = vpop.f32.mrb[0].mxu0
          %v850 = vadd.f32 0.0, %v849
          %v851 = vpop.f32.mrb[0].mxu0
          %v852 = vpop.f32.mrb[0].mxu0
          %v853 = vadd.f32 0.0, %v852
          %v854 = vpop.f32.mrb[0].mxu0
          %855 = vmatprep.mubr.bf16.mxu0 %v622
          %856 = vmatmul.mubr.bf16.gmra.mrb[0].mxu0 %v621
          %v857 = vpop.f32.mrb[0].mxu0
          %v858 = vadd.f32 0.0, %v857
          %v859 = vpop.f32.mrb[0].mxu0
          %v860 = vpop.f32.mrb[0].mxu0
          %v861 = vadd.f32 0.0, %v860
          %v862 = vpop.f32.mrb[0].mxu0
          %863 = vmatprep.mubr.bf16.mxu0 %v624
          %864 = vmatmul.mubr.bf16.gmra.mrb[0].mxu0 %v623
          %v865 = vpop.f32.mrb[0].mxu0
          %v866 = vadd.f32 0.0, %v865
          %v867 = vpop.f32.mrb[0].mxu0
          %v868 = vpop.f32.mrb[0].mxu0
          %v869 = vadd.f32 0.0, %v868
          %v870 = vpop.f32.mrb[0].mxu0
          %871 = vmatprep.mubr.bf16.mxu0 %v626
          %872 = vmatmul.mubr.bf16.gmra.mrb[0].mxu0 %v625
          %v873 = vpop.f32.mrb[0].mxu0
          %v874 = vadd.f32 0.0, %v873
          %v875 = vpop.f32.mrb[0].mxu0
          %v876 = vpop.f32.mrb[0].mxu0
          %v877 = vadd.f32 0.0, %v876
          %v878 = vpop.f32.mrb[0].mxu0
          %879 = vmatprep.mubr.bf16.mxu0 %v628
          %880 = vmatmul.mubr.bf16.gmra.mrb[0].mxu0 %v627
          %v881 = vpop.f32.mrb[0].mxu0
          %v882 = vadd.f32 0.0, %v881
          %v883 = vpop.f32.mrb[0].mxu0
          %v884 = vpop.f32.mrb[0].mxu0
          %v885 = vadd.f32 0.0, %v884
          %v886 = vpop.f32.mrb[0].mxu0
          %887 = vmatprep.mubr.bf16.mxu0 %v630
          %888 = vmatmul.mubr.bf16.gmra.mrb[0].mxu0 %v629
          %v889 = vpop.f32.mrb[0].mxu0
          %v890 = vadd.f32 0.0, %v889
          %v891 = vpop.f32.mrb[0].mxu0
          %v892 = vpop.f32.mrb[0].mxu0
          %v893 = vadd.f32 0.0, %v892
          %v894 = vpop.f32.mrb[0].mxu0
          %895 = vmatprep.mubr.bf16.mxu0 %v632
          %896 = vmatmul.mubr.bf16.gmra.mrb[0].mxu0 %v631
          %v897 = vpop.f32.mrb[0].mxu0
          %v898 = vadd.f32 0.0, %v897
          %v899 = vpop.f32.mrb[0].mxu0
          %v900 = vpop.f32.mrb[0].mxu0
          %v901 = vadd.f32 0.0, %v900
          %v902 = vpop.f32.mrb[0].mxu0
          %903 = vmatprep.mubr.bf16.mxu0 %v634
          %904 = vmatmul.mubr.bf16.gmra.mrb[0].mxu0 %v633
          %v905 = vpop.f32.mrb[0].mxu0
          %v906 = vadd.f32 0.0, %v905
          %v907 = vpop.f32.mrb[0].mxu0
          %v908 = vpop.f32.mrb[0].mxu0
          %v909 = vadd.f32 0.0, %v908
          %v910 = vpop.f32.mrb[0].mxu0
          %911 = vmatprep.mubr.bf16.mxu0 %v636
          %912 = vmatmul.mubr.bf16.gmra.mrb[0].mxu0 %v635
          %v913 = vpop.f32.mrb[0].mxu0
          %v914 = vadd.f32 0.0, %v913
          %v915 = vpop.f32.mrb[0].mxu0
          %v916 = vpop.f32.mrb[0].mxu0
          %v917 = vadd.f32 0.0, %v916
          %v918 = vpop.f32.mrb[0].mxu0
          %919 = vmatprep.mubr.bf16.mxu0 %v638
          %920 = vmatmul.mubr.bf16.gmra.mrb[0].mxu0 %v637
          %v921 = vpop.f32.mrb[0].mxu0
          %v922 = vadd.f32 0.0, %v921
          %v923 = vpop.f32.mrb[0].mxu0
          %v924 = vpop.f32.mrb[0].mxu0
          %v925 = vadd.f32 0.0, %v924
          %v926 = vpop.f32.mrb[0].mxu0
          %927 = vdwg.mxu0
          %v928 = vpack.c.bf16 %v805, %v802
          %v929 = vpack.c.bf16 %v813, %v810
          %v930 = vpack.c.bf16 %v821, %v818
          %v931 = vpack.c.bf16 %v829, %v826
          %v932 = vpack.c.bf16 %v837, %v834
          %v933 = vpack.c.bf16 %v845, %v842
          %v934 = vpack.c.bf16 %v853, %v850
          %v935 = vpack.c.bf16 %v861, %v858
          %v936 = vpack.c.bf16 %v869, %v866
          %v937 = vpack.c.bf16 %v877, %v874
          %v938 = vpack.c.bf16 %v885, %v882
          %v939 = vpack.c.bf16 %v893, %v890
          %v940 = vpack.c.bf16 %v901, %v898
          %v941 = vpack.c.bf16 %v909, %v906
          %v942 = vpack.c.bf16 %v917, %v914
          %v943 = vpack.c.bf16 %v925, %v922
          %944 = vst [vmem:[#allocation2] sm:$0xff] %v928
          %945 = vst [vmem:[#allocation2 + $0x8] sm:$0xff] %v929
          %946 = vst [vmem:[#allocation2 + $0x10] sm:$0xff] %v930
          %947 = vst [vmem:[#allocation2 + $0x18] sm:$0xff] %v931
          %948 = vst [vmem:[#allocation2 + $0x20] sm:$0xff] %v932
          %949 = vst [vmem:[#allocation2 + $0x28] sm:$0xff] %v933
          %950 = vst [vmem:[#allocation2 + $0x30] sm:$0xff] %v934
          %951 = vst [vmem:[#allocation2 + $0x38] sm:$0xff] %v935
          %952 = vst [vmem:[#allocation2 + $0x40] sm:$0xff] %v936
          %953 = vst [vmem:[#allocation2 + $0x48] sm:$0xff] %v937
          %954 = vst [vmem:[#allocation2 + $0x50] sm:$0xff] %v938
          %955 = vst [vmem:[#allocation2 + $0x58] sm:$0xff] %v939
          %956 = vst [vmem:[#allocation2 + $0x60] sm:$0xff] %v940
          %957 = vst [vmem:[#allocation2 + $0x68] sm:$0xff] %v941
          %958 = vst [vmem:[#allocation2 + $0x70] sm:$0xff] %v942
          %959 = vst [vmem:[#allocation2 + $0x78] sm:$0xff] %v943
          %960 = vst [vmem:[#allocation3] sm:$0xff] 0.0
          %vm961 = vcmask 7168
          %962 = vst.msk [vmem:[#allocation4] sm:$0xff] %vm961, 0.0
          %v963 = vld [vmem:[%s5] sm:$0xff]
          %v964 = vld [vmem:[%s5 + $0x8] sm:$0xff]
          %v965 = vld [vmem:[%s5 + $0x10] sm:$0xff]
          %v966 = vld [vmem:[%s5 + $0x18] sm:$0xff]
          %v967 = vld [vmem:[%s6] sm:$0xff]
          %v968 = vld [vmem:[%s6 + $0x8] sm:$0xff]
          %v969 = vld [vmem:[%s6 + $0x10] sm:$0xff]
          %v970 = vld [vmem:[%s6 + $0x18] sm:$0xff]
          %v971 = vld [vmem:[%s6 + $0x20] sm:$0xff]
          %v972 = vld [vmem:[%s6 + $0x28] sm:$0xff]
          %v973 = vld [vmem:[%s6 + $0x30] sm:$0xff]
          %v974 = vld [vmem:[%s6 + $0x38] sm:$0xff]
          %v975 = vld [vmem:[%s6 + $0x40] sm:$0xff]
          %v976 = vld [vmem:[%s6 + $0x48] sm:$0xff]
          %v977 = vld [vmem:[%s6 + $0x50] sm:$0xff]
          %v978 = vld [vmem:[%s6 + $0x58] sm:$0xff]
          %v979 = vld [vmem:[%s6 + $0x60] sm:$0xff]
          %v980 = vld [vmem:[%s6 + $0x68] sm:$0xff]
          %v981 = vld [vmem:[%s6 + $0x70] sm:$0xff]
          %v982 = vld [vmem:[%s6 + $0x78] sm:$0xff]
          %v983 = vld [vmem:[%s6 + $0x80] sm:$0xff]
          %v984 = vld [vmem:[%s6 + $0x88] sm:$0xff]
          %v985 = vld [vmem:[%s6 + $0x90] sm:$0xff]
          %v986 = vld [vmem:[%s6 + $0x98] sm:$0xff]
          %v987 = vld [vmem:[%s6 + $0xa0] sm:$0xff]
          %v988 = vld [vmem:[%s6 + $0xa8] sm:$0xff]
          %v989 = vld [vmem:[%s6 + $0xb0] sm:$0xff]
          %v990 = vld [vmem:[%s6 + $0xb8] sm:$0xff]
          %v991 = vld [vmem:[%s6 + $0xc0] sm:$0xff]
          %v992 = vld [vmem:[%s6 + $0xc8] sm:$0xff]
          %v993 = vld [vmem:[%s6 + $0xd0] sm:$0xff]
          %v994 = vld [vmem:[%s6 + $0xd8] sm:$0xff]
          %v995 = vld [vmem:[%s6 + $0xe0] sm:$0xff]
          %v996 = vld [vmem:[%s6 + $0xe8] sm:$0xff]
          %v997 = vld [vmem:[%s6 + $0xf0] sm:$0xff]
          %v998 = vld [vmem:[%s6 + $0xf8] sm:$0xff]
          %v1003 = vunpack.c.l.b16 %v963
          %v1004 = vunpack.c.h.b16 %v963
          %v1005 = vunpack.c.l.b16 %v964
          %v1006 = vunpack.c.h.b16 %v964
          %v1007 = vunpack.c.l.b16 %v965
          %v1008 = vunpack.c.h.b16 %v965
          %v1009 = vunpack.c.l.b16 %v966
          %v1010 = vunpack.c.h.b16 %v966
          %v1011 = vpack.c.b16 %v1005, %v1003
          %v1012 = vpack.c.b16 %v1006, %v1004
          %v1013 = vpack.c.b16 %v1009, %v1007
          %v1014 = vpack.c.b16 %v1010, %v1008
          %v1051 = vunpack.c.l.b16 %v967
          %v1052 = vunpack.c.h.b16 %v967
          %v1053 = vunpack.c.l.b16 %v968
          %v1054 = vunpack.c.h.b16 %v968
          %v1055 = vunpack.c.l.b16 %v969
          %v1056 = vunpack.c.h.b16 %v969
          %v1057 = vunpack.c.l.b16 %v970
          %v1058 = vunpack.c.h.b16 %v970
          %v1059 = vunpack.c.l.b16 %v971
          %v1060 = vunpack.c.h.b16 %v971
          %v1061 = vunpack.c.l.b16 %v972
          %v1062 = vunpack.c.h.b16 %v972
          %v1063 = vunpack.c.l.b16 %v973
          %v1064 = vunpack.c.h.b16 %v973
          %v1065 = vunpack.c.l.b16 %v974
          %v1066 = vunpack.c.h.b16 %v974
          %v1067 = vunpack.c.l.b16 %v975
          %v1068 = vunpack.c.h.b16 %v975
          %v1069 = vunpack.c.l.b16 %v976
          %v1070 = vunpack.c.h.b16 %v976
          %v1071 = vunpack.c.l.b16 %v977
          %v1072 = vunpack.c.h.b16 %v977
          %v1073 = vunpack.c.l.b16 %v978
          %v1074 = vunpack.c.h.b16 %v978
          %v1075 = vunpack.c.l.b16 %v979
          %v1076 = vunpack.c.h.b16 %v979
          %v1077 = vunpack.c.l.b16 %v980
          %v1078 = vunpack.c.h.b16 %v980
          %v1079 = vunpack.c.l.b16 %v981
          %v1080 = vunpack.c.h.b16 %v981
          %v1081 = vunpack.c.l.b16 %v982
          %v1082 = vunpack.c.h.b16 %v982
          %v1083 = vunpack.c.l.b16 %v983
          %v1084 = vunpack.c.h.b16 %v983
          %v1085 = vunpack.c.l.b16 %v984
          %v1086 = vunpack.c.h.b16 %v984
          %v1087 = vunpack.c.l.b16 %v985
          %v1088 = vunpack.c.h.b16 %v985
          %v1089 = vunpack.c.l.b16 %v986
          %v1090 = vunpack.c.h.b16 %v986
          %v1091 = vunpack.c.l.b16 %v987
          %v1092 = vunpack.c.h.b16 %v987
          %v1093 = vunpack.c.l.b16 %v988
          %v1094 = vunpack.c.h.b16 %v988
          %v1095 = vunpack.c.l.b16 %v989
          %v1096 = vunpack.c.h.b16 %v989
          %v1097 = vunpack.c.l.b16 %v990
          %v1098 = vunpack.c.h.b16 %v990
          %v1099 = vunpack.c.l.b16 %v991
          %v1100 = vunpack.c.h.b16 %v991
          %v1101 = vunpack.c.l.b16 %v992
          %v1102 = vunpack.c.h.b16 %v992
          %v1103 = vunpack.c.l.b16 %v993
          %v1104 = vunpack.c.h.b16 %v993
          %v1105 = vunpack.c.l.b16 %v994
          %v1106 = vunpack.c.h.b16 %v994
          %v1107 = vunpack.c.l.b16 %v995
          %v1108 = vunpack.c.h.b16 %v995
          %v1109 = vunpack.c.l.b16 %v996
          %v1110 = vunpack.c.h.b16 %v996
          %v1111 = vunpack.c.l.b16 %v997
          %v1112 = vunpack.c.h.b16 %v997
          %v1113 = vunpack.c.l.b16 %v998
          %v1114 = vunpack.c.h.b16 %v998
          %v1115 = vpack.c.b16 %v1053, %v1051
          %v1116 = vpack.c.b16 %v1054, %v1052
          %v1117 = vpack.c.b16 %v1057, %v1055
          %v1118 = vpack.c.b16 %v1058, %v1056
          %v1119 = vpack.c.b16 %v1061, %v1059
          %v1120 = vpack.c.b16 %v1062, %v1060
          %v1121 = vpack.c.b16 %v1065, %v1063
          %v1122 = vpack.c.b16 %v1066, %v1064
          %v1123 = vpack.c.b16 %v1069, %v1067
          %v1124 = vpack.c.b16 %v1070, %v1068
          %v1125 = vpack.c.b16 %v1073, %v1071
          %v1126 = vpack.c.b16 %v1074, %v1072
          %v1127 = vpack.c.b16 %v1077, %v1075
          %v1128 = vpack.c.b16 %v1078, %v1076
          %v1129 = vpack.c.b16 %v1081, %v1079
          %v1130 = vpack.c.b16 %v1082, %v1080
          %v1131 = vpack.c.b16 %v1085, %v1083
          %v1132 = vpack.c.b16 %v1086, %v1084
          %v1133 = vpack.c.b16 %v1089, %v1087
          %v1134 = vpack.c.b16 %v1090, %v1088
          %v1135 = vpack.c.b16 %v1093, %v1091
          %v1136 = vpack.c.b16 %v1094, %v1092
          %v1137 = vpack.c.b16 %v1097, %v1095
          %v1138 = vpack.c.b16 %v1098, %v1096
          %v1139 = vpack.c.b16 %v1101, %v1099
          %v1140 = vpack.c.b16 %v1102, %v1100
          %v1141 = vpack.c.b16 %v1105, %v1103
          %v1142 = vpack.c.b16 %v1106, %v1104
          %v1143 = vpack.c.b16 %v1109, %v1107
          %v1144 = vpack.c.b16 %v1110, %v1108
          %v1145 = vpack.c.b16 %v1113, %v1111
          %v1146 = vpack.c.b16 %v1114, %v1112
          %1179 = vmatprep.subr.bf16.mxu0 %v1116
          %1180 = vmatpush1.bf16.msra.mxu0 %v1115
          %1181 = vmatprep.subr.bf16.mxu0 %v1118
          %1182 = vmatpush1.bf16.msra.mxu0 %v1117
          %1183 = vmatprep.subr.bf16.mxu0 %v1120
          %1184 = vmatpush1.bf16.msra.mxu0 %v1119
          %1185 = vmatprep.subr.bf16.mxu0 %v1122
          %1186 = vmatpush1.bf16.msra.mxu0 %v1121
          %1187 = vmatprep.subr.bf16.mxu0 %v1124
          %1188 = vmatpush1.bf16.msra.mxu0 %v1123
          %1189 = vmatprep.subr.bf16.mxu0 %v1126
          %1190 = vmatpush1.bf16.msra.mxu0 %v1125
          %1191 = vmatprep.subr.bf16.mxu0 %v1128
          %1192 = vmatpush1.bf16.msra.mxu0 %v1127
          %1193 = vmatprep.subr.bf16.mxu0 %v1130
          %1194 = vmatpush1.bf16.msra.mxu0 %v1129
          %1195 = vmatprep.subr.bf16.mxu0 %v1132
          %1196 = vmatpush1.bf16.msra.mxu0 %v1131
          %1197 = vmatprep.subr.bf16.mxu0 %v1134
          %1198 = vmatpush1.bf16.msra.mxu0 %v1133
          %1199 = vmatprep.subr.bf16.mxu0 %v1136
          %1200 = vmatpush1.bf16.msra.mxu0 %v1135
          %1201 = vmatprep.subr.bf16.mxu0 %v1138
          %1202 = vmatpush1.bf16.msra.mxu0 %v1137
          %1203 = vmatprep.subr.bf16.mxu0 %v1140
          %1204 = vmatpush1.bf16.msra.mxu0 %v1139
          %1205 = vmatprep.subr.bf16.mxu0 %v1142
          %1206 = vmatpush1.bf16.msra.mxu0 %v1141
          %1207 = vmatprep.subr.bf16.mxu0 %v1144
          %1208 = vmatpush1.bf16.msra.mxu0 %v1143
          %1209 = vmatprep.subr.bf16.mxu0 %v1146
          %1210 = vmatpush1.bf16.msra.mxu0 %v1145
          %1211 = vmatprep.mubr.bf16.mxu0 %v1012
          %1212 = vmatmul.mubr.bf16.gmra.mrb[0].mxu0 %v1011
          %v1213 = vpop.f32.mrb[0].mxu0
          %v1214 = vadd.f32 0.0, %v1213
          %v1215 = vpop.f32.mrb[0].mxu0
          %v1216 = vadd.f32 0.0, %v1215
          %v1217 = vpop.f32.mrb[0].mxu0
          %v1218 = vadd.f32 0.0, %v1217
          %v1219 = vpop.f32.mrb[0].mxu0
          %v1220 = vadd.f32 0.0, %v1219
          %1221 = vmatprep.mubr.bf16.mxu0 %v1014
          %1222 = vmatmul.mubr.bf16.gmra.mrb[0].mxu0 %v1013
          %v1223 = vpop.f32.mrb[0].mxu0
          %v1224 = vadd.f32 0.0, %v1223
          %v1225 = vpop.f32.mrb[0].mxu0
          %v1226 = vadd.f32 0.0, %v1225
          %v1227 = vpop.f32.mrb[0].mxu0
          %v1228 = vadd.f32 0.0, %v1227
          %v1229 = vpop.f32.mrb[0].mxu0
          %v1230 = vadd.f32 0.0, %v1229
          %1231 = vdwg.mxu0
          %v1232 = vpack.c.bf16 %v1218, %v1214
          %v1233 = vpack.c.bf16 %v1220, %v1216
          %v1234 = vpack.c.bf16 %v1228, %v1224
          %v1235 = vpack.c.bf16 %v1230, %v1226
          %v1236 = vld [vmem:[%s7] sm:$0xf]
          %v1237 = vld [vmem:[%s7 + $0x4] sm:$0xf]
          %v1238 = vld [vmem:[%s7 + $0x8] sm:$0xf]
          %v1239 = vld [vmem:[%s7 + $0xc] sm:$0xf]
          %v1240 = vld [vmem:[%s7 + $0x10] sm:$0xf]
          %v1241 = vld [vmem:[%s7 + $0x14] sm:$0xf]
          %v1242 = vld [vmem:[%s7 + $0x18] sm:$0xf]
          %v1243 = vld [vmem:[%s7 + $0x1c] sm:$0xf]
          %v1244 = vld [vmem:[%s7 + $0x20] sm:$0xf]
          %v1245 = vld [vmem:[%s7 + $0x24] sm:$0xf]
          %v1246 = vld [vmem:[%s7 + $0x28] sm:$0xf]
          %v1247 = vld [vmem:[%s7 + $0x2c] sm:$0xf]
          %v1248 = vld [vmem:[%s7 + $0x30] sm:$0xf]
          %v1249 = vld [vmem:[%s7 + $0x34] sm:$0xf]
          %v1250 = vld [vmem:[%s7 + $0x38] sm:$0xf]
          %v1251 = vld [vmem:[%s7 + $0x3c] sm:$0xf]
          %v1252 = vld [vmem:[%s7 + $0x40] sm:$0xf]
          %v1253 = vld [vmem:[%s7 + $0x44] sm:$0xf]
          %v1254 = vld [vmem:[%s7 + $0x48] sm:$0xf]
          %v1255 = vld [vmem:[%s7 + $0x4c] sm:$0xf]
          %v1256 = vld [vmem:[%s7 + $0x50] sm:$0xf]
          %v1257 = vld [vmem:[%s7 + $0x54] sm:$0xf]
          %v1258 = vld [vmem:[%s7 + $0x58] sm:$0xf]
          %v1259 = vld [vmem:[%s7 + $0x5c] sm:$0xf]
          %v1260 = vld [vmem:[%s7 + $0x60] sm:$0xf]
          %v1261 = vld [vmem:[%s7 + $0x64] sm:$0xf]
          %v1262 = vld [vmem:[%s7 + $0x68] sm:$0xf]
          %v1263 = vld [vmem:[%s7 + $0x6c] sm:$0xf]
          %v1264 = vld [vmem:[%s7 + $0x70] sm:$0xf]
          %v1265 = vld [vmem:[%s7 + $0x74] sm:$0xf]
          %v1266 = vld [vmem:[%s7 + $0x78] sm:$0xf]
          %v1267 = vld [vmem:[%s7 + $0x7c] sm:$0xf]
          %v1268 = vld [vmem:[%s8] sm:$0x1]
          %v1270 = vlaneseq
          %v1271 = vshrl.u32 %v1270, 7
          %v1272 = vsub.s32 0, %v1271
          %v1273 = vrot.slane %v1268, %v1272
          %v1307 = vunpack.c.l.b16 %v1236
          %v1308 = vunpack.c.l.b16 %v1237
          %v1309 = vunpack.c.l.b16 %v1238
          %v1310 = vunpack.c.l.b16 %v1239
          %v1311 = vunpack.c.l.b16 %v1240
          %v1312 = vunpack.c.l.b16 %v1241
          %v1313 = vunpack.c.l.b16 %v1242
          %v1314 = vunpack.c.l.b16 %v1243
          %v1315 = vunpack.c.l.b16 %v1244
          %v1316 = vunpack.c.l.b16 %v1245
          %v1317 = vunpack.c.l.b16 %v1246
          %v1318 = vunpack.c.l.b16 %v1247
          %v1319 = vunpack.c.l.b16 %v1248
          %v1320 = vunpack.c.l.b16 %v1249
          %v1321 = vunpack.c.l.b16 %v1250
          %v1322 = vunpack.c.l.b16 %v1251
          %v1323 = vunpack.c.l.b16 %v1252
          %v1324 = vunpack.c.l.b16 %v1253
          %v1325 = vunpack.c.l.b16 %v1254
          %v1326 = vunpack.c.l.b16 %v1255
          %v1327 = vunpack.c.l.b16 %v1256
          %v1328 = vunpack.c.l.b16 %v1257
          %v1329 = vunpack.c.l.b16 %v1258
          %v1330 = vunpack.c.l.b16 %v1259
          %v1331 = vunpack.c.l.b16 %v1260
          %v1332 = vunpack.c.l.b16 %v1261
          %v1333 = vunpack.c.l.b16 %v1262
          %v1334 = vunpack.c.l.b16 %v1263
          %v1335 = vunpack.c.l.b16 %v1264
          %v1336 = vunpack.c.l.b16 %v1265
          %v1337 = vunpack.c.l.b16 %v1266
          %v1338 = vunpack.c.l.b16 %v1267
          %v1339 = vpack.c.b16 %v1308, %v1307
          %v1340 = vpack.c.b16 %v1310, %v1309
          %v1341 = vpack.c.b16 %v1312, %v1311
          %v1342 = vpack.c.b16 %v1314, %v1313
          %v1343 = vpack.c.b16 %v1316, %v1315
          %v1344 = vpack.c.b16 %v1318, %v1317
          %v1345 = vpack.c.b16 %v1320, %v1319
          %v1346 = vpack.c.b16 %v1322, %v1321
          %v1347 = vpack.c.b16 %v1324, %v1323
          %v1348 = vpack.c.b16 %v1326, %v1325
          %v1349 = vpack.c.b16 %v1328, %v1327
          %v1350 = vpack.c.b16 %v1330, %v1329
          %v1351 = vpack.c.b16 %v1332, %v1331
          %v1352 = vpack.c.b16 %v1334, %v1333
          %v1353 = vpack.c.b16 %v1336, %v1335
          %v1354 = vpack.c.b16 %v1338, %v1337
          %1371 = vmatprep.subr.bf16.mxu0 0
          %1372 = vmatpush1.bf16.msra.mxu0 %v1339
          %1373 = vmatprep.subr.bf16.mxu0 0
          %1374 = vmatpush1.bf16.msra.mxu0 %v1340
          %1375 = vmatprep.subr.bf16.mxu0 0
          %1376 = vmatpush1.bf16.msra.mxu0 %v1341
          %1377 = vmatprep.subr.bf16.mxu0 0
          %1378 = vmatpush1.bf16.msra.mxu0 %v1342
          %1379 = vmatprep.subr.bf16.mxu0 0
          %1380 = vmatpush1.bf16.msra.mxu0 %v1343
          %1381 = vmatprep.subr.bf16.mxu0 0
          %1382 = vmatpush1.bf16.msra.mxu0 %v1344
          %1383 = vmatprep.subr.bf16.mxu0 0
          %1384 = vmatpush1.bf16.msra.mxu0 %v1345
          %1385 = vmatprep.subr.bf16.mxu0 0
          %1386 = vmatpush1.bf16.msra.mxu0 %v1346
          %1387 = vmatprep.subr.bf16.mxu0 0
          %1388 = vmatpush1.bf16.msra.mxu0 %v1347
          %1389 = vmatprep.subr.bf16.mxu0 0
          %1390 = vmatpush1.bf16.msra.mxu0 %v1348
          %1391 = vmatprep.subr.bf16.mxu0 0
          %1392 = vmatpush1.bf16.msra.mxu0 %v1349
          %1393 = vmatprep.subr.bf16.mxu0 0
          %1394 = vmatpush1.bf16.msra.mxu0 %v1350
          %1395 = vmatprep.subr.bf16.mxu0 0
          %1396 = vmatpush1.bf16.msra.mxu0 %v1351
          %1397 = vmatprep.subr.bf16.mxu0 0
          %1398 = vmatpush1.bf16.msra.mxu0 %v1352
          %1399 = vmatprep.subr.bf16.mxu0 0
          %1400 = vmatpush1.bf16.msra.mxu0 %v1353
          %1401 = vmatprep.subr.bf16.mxu0 0
          %1402 = vmatpush1.bf16.msra.mxu0 %v1354
          %1403 = vmatprep.mubr.bf16.mxu0 %v1233
          %1404 = vmatmul.mubr.bf16.gmra.mrb[0].mxu0 %v1232
          %v1405 = vpop.f32.mrb[0].mxu0
          %v1406 = vadd.f32 %v1273, %v1405
          %v1407 = vpop.f32.mrb[0].mxu0
          %v1408 = vpop.f32.mrb[0].mxu0
          %v1409 = vadd.f32 %v1273, %v1408
          %v1410 = vpop.f32.mrb[0].mxu0
          %1411 = vmatprep.mubr.bf16.mxu0 %v1235
          %1412 = vmatmul.mubr.bf16.gmra.mrb[0].mxu0 %v1234
          %v1413 = vpop.f32.mrb[0].mxu0
          %v1414 = vadd.f32 %v1273, %v1413
          %v1415 = vpop.f32.mrb[0].mxu0
          %v1416 = vpop.f32.mrb[0].mxu0
          %v1417 = vadd.f32 %v1273, %v1416
          %v1418 = vpop.f32.mrb[0].mxu0
          %1419 = vdwg.mxu0
          %v1420 = vmax.f32 %v1406, 0.0
          %v1421 = vmax.f32 %v1409, 0.0
          %v1422 = vmax.f32 %v1414, 0.0
          %v1423 = vmax.f32 %v1417, 0.0
          %v1424 = vpack.c.bf16 %v1421, %v1420
          %v1425 = vpack.c.bf16 %v1423, %v1422
          %v1426 = vld [vmem:[%s9] sm:$0xf]
          %v1427 = vld [vmem:[%s9 + $0x4] sm:$0xf]
          %v1428 = vld [vmem:[%s9 + $0x8] sm:$0xf]
          %v1429 = vld [vmem:[%s9 + $0xc] sm:$0xf]
          %v1430 = vld [vmem:[%s9 + $0x10] sm:$0xf]
          %v1431 = vld [vmem:[%s9 + $0x14] sm:$0xf]
          %v1432 = vld [vmem:[%s9 + $0x18] sm:$0xf]
          %v1433 = vld [vmem:[%s9 + $0x1c] sm:$0xf]
          %v1434 = vld [vmem:[%s9 + $0x20] sm:$0xf]
          %v1435 = vld [vmem:[%s9 + $0x24] sm:$0xf]
          %v1436 = vld [vmem:[%s9 + $0x28] sm:$0xf]
          %v1437 = vld [vmem:[%s9 + $0x2c] sm:$0xf]
          %v1438 = vld [vmem:[%s9 + $0x30] sm:$0xf]
          %v1439 = vld [vmem:[%s9 + $0x34] sm:$0xf]
          %v1440 = vld [vmem:[%s9 + $0x38] sm:$0xf]
          %v1441 = vld [vmem:[%s9 + $0x3c] sm:$0xf]
          %v1442 = vld [vmem:[%s10] sm:$0x1]
          %v1444 = vlaneseq
          %v1445 = vshrl.u32 %v1444, 7
          %v1446 = vsub.s32 0, %v1445
          %v1447 = vrot.slane %v1442, %v1446
          %v1465 = vunpack.c.l.b16 %v1426
          %v1466 = vunpack.c.l.b16 %v1427
          %v1467 = vunpack.c.l.b16 %v1428
          %v1468 = vunpack.c.l.b16 %v1429
          %v1469 = vunpack.c.l.b16 %v1430
          %v1470 = vunpack.c.l.b16 %v1431
          %v1471 = vunpack.c.l.b16 %v1432
          %v1472 = vunpack.c.l.b16 %v1433
          %v1473 = vunpack.c.l.b16 %v1434
          %v1474 = vunpack.c.l.b16 %v1435
          %v1475 = vunpack.c.l.b16 %v1436
          %v1476 = vunpack.c.l.b16 %v1437
          %v1477 = vunpack.c.l.b16 %v1438
          %v1478 = vunpack.c.l.b16 %v1439
          %v1479 = vunpack.c.l.b16 %v1440
          %v1480 = vunpack.c.l.b16 %v1441
          %v1481 = vpack.c.b16 %v1466, %v1465
          %v1482 = vpack.c.b16 %v1468, %v1467
          %v1483 = vpack.c.b16 %v1470, %v1469
          %v1484 = vpack.c.b16 %v1472, %v1471
          %v1485 = vpack.c.b16 %v1474, %v1473
          %v1486 = vpack.c.b16 %v1476, %v1475
          %v1487 = vpack.c.b16 %v1478, %v1477
          %v1488 = vpack.c.b16 %v1480, %v1479
          %1497 = vmatprep.subr.bf16.mxu0 0
          %1498 = vmatpush1.bf16.msra.mxu0 %v1481
          %1499 = vmatprep.subr.bf16.mxu0 0
          %1500 = vmatpush1.bf16.msra.mxu0 %v1482
          %1501 = vmatprep.subr.bf16.mxu0 0
          %1502 = vmatpush1.bf16.msra.mxu0 %v1483
          %1503 = vmatprep.subr.bf16.mxu0 0
          %1504 = vmatpush1.bf16.msra.mxu0 %v1484
          %1505 = vmatprep.subr.bf16.mxu0 0
          %1506 = vmatpush1.bf16.msra.mxu0 %v1485
          %1507 = vmatprep.subr.bf16.mxu0 0
          %1508 = vmatpush1.bf16.msra.mxu0 %v1486
          %1509 = vmatprep.subr.bf16.mxu0 0
          %1510 = vmatpush1.bf16.msra.mxu0 %v1487
          %1511 = vmatprep.subr.bf16.mxu0 0
          %1512 = vmatpush1.bf16.msra.mxu0 %v1488
          %1513 = vmatprep.subr.bf16.mxu0 0
          %1514 = vmatpush1.bf16.msra.mxu0 0
          %1515 = vmatprep.subr.bf16.mxu0 0
          %1516 = vmatpush1.bf16.msra.mxu0 0
          %1517 = vmatprep.subr.bf16.mxu0 0
          %1518 = vmatpush1.bf16.msra.mxu0 0
          %1519 = vmatprep.subr.bf16.mxu0 0
          %1520 = vmatpush1.bf16.msra.mxu0 0
          %1521 = vmatprep.subr.bf16.mxu0 0
          %1522 = vmatpush1.bf16.msra.mxu0 0
          %1523 = vmatprep.subr.bf16.mxu0 0
          %1524 = vmatpush1.bf16.msra.mxu0 0
          %1525 = vmatprep.subr.bf16.mxu0 0
          %1526 = vmatpush1.bf16.msra.mxu0 0
          %1527 = vmatprep.subr.bf16.mxu0 0
          %1528 = vmatpush1.bf16.msra.mxu0 0
          %1529 = vmatprep.mubr.bf16.mxu0 0
          %1530 = vmatmul.mubr.bf16.gmra.mrb[0].mxu0 %v1424
          %v1531 = vpop.f32.mrb[0].mxu0
          %v1532 = vadd.f32 %v1447, %v1531
          %v1533 = vpop.f32.mrb[0].mxu0
          %v1534 = vpop.f32.mrb[0].mxu0
          %v1535 = vadd.f32 %v1447, %v1534
          %v1536 = vpop.f32.mrb[0].mxu0
          %1537 = vmatprep.mubr.bf16.mxu0 0
          %1538 = vmatmul.mubr.bf16.gmra.mrb[0].mxu0 %v1425
          %v1539 = vpop.f32.mrb[0].mxu0
          %v1540 = vadd.f32 %v1447, %v1539
          %v1541 = vpop.f32.mrb[0].mxu0
          %v1542 = vpop.f32.mrb[0].mxu0
          %v1543 = vadd.f32 %v1447, %v1542
          %v1544 = vpop.f32.mrb[0].mxu0
          %1545 = vdwg.mxu0
          %1546 = vst [vmem:[#allocation5] sm:$0xff] %v1532
          %1547 = vst [vmem:[#allocation5 + $0x8] sm:$0xff] %v1535
          %1548 = vst [vmem:[#allocation5 + $0x10] sm:$0xff] %v1540
          %1549 = vst [vmem:[#allocation5 + $0x18] sm:$0xff] %v1543
        $region68: #{bourne_forward.1} parent=63 // pred_fallthru
          _
        %v1550 = vld [vmem:[%s440] sm:$0xff]
        %v1551 = vld [vmem:[%s440 + $0x8] sm:$0xff]
        %v1552 = vld [vmem:[%s440 + $0x10] sm:$0xff]
        %v1553 = vld [vmem:[%s440 + $0x18] sm:$0xff]
        %v1554 = vld [vmem:[%s440 + $0x20] sm:$0xff]
        %v1555 = vld [vmem:[%s440 + $0x28] sm:$0xff]
        %v1556 = vld [vmem:[%s440 + $0x30] sm:$0xff]
        %v1557 = vld [vmem:[%s440 + $0x38] sm:$0xff]
        %v1558 = vld [vmem:[%s440 + $0x40] sm:$0xff]
        %v1559 = vld [vmem:[%s440 + $0x48] sm:$0xff]
        %v1560 = vld [vmem:[%s440 + $0x50] sm:$0xff]
        %v1561 = vld [vmem:[%s440 + $0x58] sm:$0xff]
        %v1562 = vld [vmem:[%s440 + $0x60] sm:$0xff]
        %v1563 = vld [vmem:[%s440 + $0x68] sm:$0xff]
        %v1564 = vld [vmem:[%s440 + $0x70] sm:$0xff]
        %v1565 = vld [vmem:[%s440 + $0x78] sm:$0xff]
        %v1566 = vld [vmem:[#allocation2] sm:$0xff]
        %v1567 = vld [vmem:[#allocation2 + $0x8] sm:$0xff]
        %v1568 = vld [vmem:[#allocation2 + $0x10] sm:$0xff]
        %v1569 = vld [vmem:[#allocation2 + $0x18] sm:$0xff]
        %v1570 = vld [vmem:[#allocation2 + $0x20] sm:$0xff]
        %v1571 = vld [vmem:[#allocation2 + $0x28] sm:$0xff]
        %v1572 = vld [vmem:[#allocation2 + $0x30] sm:$0xff]
        %v1573 = vld [vmem:[#allocation2 + $0x38] sm:$0xff]
        %v1574 = vld [vmem:[#allocation2 + $0x40] sm:$0xff]
        %v1575 = vld [vmem:[#allocation2 + $0x48] sm:$0xff]
        %v1576 = vld [vmem:[#allocation2 + $0x50] sm:$0xff]
        %v1577 = vld [vmem:[#allocation2 + $0x58] sm:$0xff]
        %v1578 = vld [vmem:[#allocation2 + $0x60] sm:$0xff]
        %v1579 = vld [vmem:[#allocation2 + $0x68] sm:$0xff]
        %v1580 = vld [vmem:[#allocation2 + $0x70] sm:$0xff]
        %v1581 = vld [vmem:[#allocation2 + $0x78] sm:$0xff]
        %v1582 = vld [vmem:[%s4] sm:$0x1]
        %v1584 = vlaneseq
        %v1585 = vshrl.u32 %v1584, 7
        %v1586 = vsub.s32 0, %v1585
        %v1587 = vrot.slane %v1582, %v1586
        %v1605 = vunpack.c.l.b16 %v1550
        %v1606 = vunpack.c.h.b16 %v1550
        %v1607 = vunpack.c.l.b16 %v1551
        %v1608 = vunpack.c.h.b16 %v1551
        %v1609 = vunpack.c.l.b16 %v1552
        %v1610 = vunpack.c.h.b16 %v1552
        %v1611 = vunpack.c.l.b16 %v1553
        %v1612 = vunpack.c.h.b16 %v1553
        %v1613 = vunpack.c.l.b16 %v1554
        %v1614 = vunpack.c.h.b16 %v1554
        %v1615 = vunpack.c.l.b16 %v1555
        %v1616 = vunpack.c.h.b16 %v1555
        %v1617 = vunpack.c.l.b16 %v1556
        %v1618 = vunpack.c.h.b16 %v1556
        %v1619 = vunpack.c.l.b16 %v1557
        %v1620 = vunpack.c.h.b16 %v1557
        %v1621 = vunpack.c.l.b16 %v1558
        %v1622 = vunpack.c.h.b16 %v1558
        %v1623 = vunpack.c.l.b16 %v1559
        %v1624 = vunpack.c.h.b16 %v1559
        %v1625 = vunpack.c.l.b16 %v1560
        %v1626 = vunpack.c.h.b16 %v1560
        %v1627 = vunpack.c.l.b16 %v1561
        %v1628 = vunpack.c.h.b16 %v1561
        %v1629 = vunpack.c.l.b16 %v1562
        %v1630 = vunpack.c.h.b16 %v1562
        %v1631 = vunpack.c.l.b16 %v1563
        %v1632 = vunpack.c.h.b16 %v1563
        %v1633 = vunpack.c.l.b16 %v1564
        %v1634 = vunpack.c.h.b16 %v1564
        %v1635 = vunpack.c.l.b16 %v1565
        %v1636 = vunpack.c.h.b16 %v1565
        %v1637 = vpack.c.b16 %v1607, %v1605
        %v1638 = vpack.c.b16 %v1608, %v1606
        %v1639 = vpack.c.b16 %v1611, %v1609
        %v1640 = vpack.c.b16 %v1612, %v1610
        %v1641 = vpack.c.b16 %v1615, %v1613
        %v1642 = vpack.c.b16 %v1616, %v1614
        %v1643 = vpack.c.b16 %v1619, %v1617
        %v1644 = vpack.c.b16 %v1620, %v1618
        %v1645 = vpack.c.b16 %v1623, %v1621
        %v1646 = vpack.c.b16 %v1624, %v1622
        %v1647 = vpack.c.b16 %v1627, %v1625
        %v1648 = vpack.c.b16 %v1628, %v1626
        %v1649 = vpack.c.b16 %v1631, %v1629
        %v1650 = vpack.c.b16 %v1632, %v1630
        %v1651 = vpack.c.b16 %v1635, %v1633
        %v1652 = vpack.c.b16 %v1636, %v1634
        %1669 = vmatprep.subr.bf16.mxu0 0
        %1670 = vmatpush1.bf16.msra.mxu0 %v1566
        %1671 = vmatprep.subr.bf16.mxu0 0
        %1672 = vmatpush1.bf16.msra.mxu0 %v1567
        %1673 = vmatprep.subr.bf16.mxu0 0
        %1674 = vmatpush1.bf16.msra.mxu0 %v1568
        %1675 = vmatprep.subr.bf16.mxu0 0
        %1676 = vmatpush1.bf16.msra.mxu0 %v1569
        %1677 = vmatprep.subr.bf16.mxu0 0
        %1678 = vmatpush1.bf16.msra.mxu0 %v1570
        %1679 = vmatprep.subr.bf16.mxu0 0
        %1680 = vmatpush1.bf16.msra.mxu0 %v1571
        %1681 = vmatprep.subr.bf16.mxu0 0
        %1682 = vmatpush1.bf16.msra.mxu0 %v1572
        %1683 = vmatprep.subr.bf16.mxu0 0
        %1684 = vmatpush1.bf16.msra.mxu0 %v1573
        %1685 = vmatprep.subr.bf16.mxu0 0
        %1686 = vmatpush1.bf16.msra.mxu0 %v1574
        %1687 = vmatprep.subr.bf16.mxu0 0
        %1688 = vmatpush1.bf16.msra.mxu0 %v1575
        %1689 = vmatprep.subr.bf16.mxu0 0
        %1690 = vmatpush1.bf16.msra.mxu0 %v1576
        %1691 = vmatprep.subr.bf16.mxu0 0
        %1692 = vmatpush1.bf16.msra.mxu0 %v1577
        %1693 = vmatprep.subr.bf16.mxu0 0
        %1694 = vmatpush1.bf16.msra.mxu0 %v1578
        %1695 = vmatprep.subr.bf16.mxu0 0
        %1696 = vmatpush1.bf16.msra.mxu0 %v1579
        %1697 = vmatprep.subr.bf16.mxu0 0
        %1698 = vmatpush1.bf16.msra.mxu0 %v1580
        %1699 = vmatprep.subr.bf16.mxu0 0
        %1700 = vmatpush1.bf16.msra.mxu0 %v1581
        %1701 = vmatprep.mubr.bf16.mxu0 %v1638
        %1702 = vmatmul.mubr.bf16.gmra.mrb[0].mxu0 %v1637
        %v1703 = vpop.f32.mrb[0].mxu0
        %v1704 = vadd.f32 %v1587, %v1703
        %v1705 = vpop.f32.mrb[0].mxu0
        %v1706 = vpop.f32.mrb[0].mxu0
        %v1707 = vadd.f32 %v1587, %v1706
        %v1708 = vpop.f32.mrb[0].mxu0
        %1709 = vmatprep.mubr.bf16.mxu0 %v1640
        %1710 = vmatmul.mubr.bf16.gmra.mrb[0].mxu0 %v1639
        %v1711 = vpop.f32.mrb[0].mxu0
        %v1712 = vadd.f32 %v1587, %v1711
        %v1713 = vpop.f32.mrb[0].mxu0
        %v1714 = vpop.f32.mrb[0].mxu0
        %v1715 = vadd.f32 %v1587, %v1714
        %v1716 = vpop.f32.mrb[0].mxu0
        %1717 = vmatprep.mubr.bf16.mxu0 %v1642
        %1718 = vmatmul.mubr.bf16.gmra.mrb[0].mxu0 %v1641
        %v1719 = vpop.f32.mrb[0].mxu0
        %v1720 = vadd.f32 %v1587, %v1719
        %v1721 = vpop.f32.mrb[0].mxu0
        %v1722 = vpop.f32.mrb[0].mxu0
        %v1723 = vadd.f32 %v1587, %v1722
        %v1724 = vpop.f32.mrb[0].mxu0
        %1725 = vmatprep.mubr.bf16.mxu0 %v1644
        %1726 = vmatmul.mubr.bf16.gmra.mrb[0].mxu0 %v1643
        %v1727 = vpop.f32.mrb[0].mxu0
        %v1728 = vadd.f32 %v1587, %v1727
        %v1729 = vpop.f32.mrb[0].mxu0
        %v1730 = vpop.f32.mrb[0].mxu0
        %v1731 = vadd.f32 %v1587, %v1730
        %v1732 = vpop.f32.mrb[0].mxu0
        %1733 = vmatprep.mubr.bf16.mxu0 %v1646
        %1734 = vmatmul.mubr.bf16.gmra.mrb[0].mxu0 %v1645
        %v1735 = vpop.f32.mrb[0].mxu0
        %v1736 = vadd.f32 %v1587, %v1735
        %v1737 = vpop.f32.mrb[0].mxu0
        %v1738 = vpop.f32.mrb[0].mxu0
        %v1739 = vadd.f32 %v1587, %v1738
        %v1740 = vpop.f32.mrb[0].mxu0
        %1741 = vmatprep.mubr.bf16.mxu0 %v1648
        %1742 = vmatmul.mubr.bf16.gmra.mrb[0].mxu0 %v1647
        %v1743 = vpop.f32.mrb[0].mxu0
        %v1744 = vadd.f32 %v1587, %v1743
        %v1745 = vpop.f32.mrb[0].mxu0
        %v1746 = vpop.f32.mrb[0].mxu0
        %v1747 = vadd.f32 %v1587, %v1746
        %v1748 = vpop.f32.mrb[0].mxu0
        %1749 = vmatprep.mubr.bf16.mxu0 %v1650
        %1750 = vmatmul.mubr.bf16.gmra.mrb[0].mxu0 %v1649
        %v1751 = vpop.f32.mrb[0].mxu0
        %v1752 = vadd.f32 %v1587, %v1751
        %v1753 = vpop.f32.mrb[0].mxu0
        %v1754 = vpop.f32.mrb[0].mxu0
        %v1755 = vadd.f32 %v1587, %v1754
        %v1756 = vpop.f32.mrb[0].mxu0
        %1757 = vmatprep.mubr.bf16.mxu0 %v1652
        %1758 = vmatmul.mubr.bf16.gmra.mrb[0].mxu0 %v1651
        %v1759 = vpop.f32.mrb[0].mxu0
        %v1760 = vadd.f32 %v1587, %v1759
        %v1761 = vpop.f32.mrb[0].mxu0
        %v1762 = vpop.f32.mrb[0].mxu0
        %v1763 = vadd.f32 %v1587, %v1762
        %v1764 = vpop.f32.mrb[0].mxu0
        %1765 = vdwg.mxu0
        %v1766 = vmax.f32 %v1704, 0.0
        %v1767 = vmax.f32 %v1707, 0.0
        %v1768 = vmax.f32 %v1712, 0.0
        %v1769 = vmax.f32 %v1715, 0.0
        %v1770 = vmax.f32 %v1720, 0.0
        %v1771 = vmax.f32 %v1723, 0.0
        %v1772 = vmax.f32 %v1728, 0.0
        %v1773 = vmax.f32 %v1731, 0.0
        %v1774 = vmax.f32 %v1736, 0.0
        %v1775 = vmax.f32 %v1739, 0.0
        %v1776 = vmax.f32 %v1744, 0.0
        %v1777 = vmax.f32 %v1747, 0.0
        %v1778 = vmax.f32 %v1752, 0.0
        %v1779 = vmax.f32 %v1755, 0.0
        %v1780 = vmax.f32 %v1760, 0.0
        %v1781 = vmax.f32 %v1763, 0.0
        // Predicated region
        $region69: #{bourne_forward.1} parent=63 // pred_check
          %p1782 = pneg %p443
        $region70: #{bourne_forward.1} parent=63 // pred_check_branch
          %1784 = sbr.rel (%p1782) target = $region72
        $region71: #{bourne_forward.1} parent=63 // pred_region
          %1785 = vst [vmem:[#allocation7] sm:$0xff] %v1766
          %1786 = vst [vmem:[#allocation7 + $0x8] sm:$0xff] %v1767
          %1787 = vst [vmem:[#allocation7 + $0x10] sm:$0xff] %v1768
          %1788 = vst [vmem:[#allocation7 + $0x18] sm:$0xff] %v1769
        $region72: #{bourne_forward.1} parent=63 // pred_fallthru
          _
        %v1789 = vld [vmem:[%s434] sm:$0x1]
        %v1790 = vlaneseq
        %v1791 = vshrl.u32 %v1790, 7
        %v1792 = vlaneseq
        %v1793 = vshrl.u32 %v1792, 7
        %v1794 = vsub.s32 0, %v1793
        %v1795 = vrot.slane %v1789, %v1794
        %vm1796 = vcmp.eq.s32.totalorder %v1795, %v1791
        %v1797 = vsel %vm1796, 1.0, 0.0
        %v1798 = vpack.c.bf16 %v1797, %v1797
        %v1799 = vld [vmem:[#allocation3] sm:$0xff]
        %v1800 = vpack.c.bf16 %v1767, %v1766
        %v1801 = vpack.c.bf16 %v1769, %v1768
        %v1802 = vpack.c.bf16 %v1771, %v1770
        %v1803 = vpack.c.bf16 %v1773, %v1772
        %v1804 = vpack.c.bf16 %v1775, %v1774
        %v1805 = vpack.c.bf16 %v1777, %v1776
        %v1806 = vpack.c.bf16 %v1779, %v1778
        %v1807 = vpack.c.bf16 %v1781, %v1780
        %1808 = vmatprep.subr.bf16.mxu0 0
        %1809 = vmatpush1.bf16.msra.mxu0 %v1800
        %1810 = vmatprep.subr.bf16.mxu0 0
        %1811 = vmatpush1.bf16.msra.mxu0 %v1801
        %1812 = vmatprep.subr.bf16.mxu0 0
        %1813 = vmatpush1.bf16.msra.mxu0 %v1802
        %1814 = vmatprep.subr.bf16.mxu0 0
        %1815 = vmatpush1.bf16.msra.mxu0 %v1803
        %1816 = vmatprep.subr.bf16.mxu0 0
        %1817 = vmatpush1.bf16.msra.mxu0 %v1804
        %1818 = vmatprep.subr.bf16.mxu0 0
        %1819 = vmatpush1.bf16.msra.mxu0 %v1805
        %1820 = vmatprep.subr.bf16.mxu0 0
        %1821 = vmatpush1.bf16.msra.mxu0 %v1806
        %1822 = vmatprep.subr.bf16.mxu0 0
        %1823 = vmatpush1.bf16.msra.mxu0 %v1807
        %1824 = vmatprep.subr.bf16.mxu0 0
        %1825 = vmatpush1.bf16.msra.mxu0 0
        %1826 = vmatprep.subr.bf16.mxu0 0
        %1827 = vmatpush1.bf16.msra.mxu0 0
        %1828 = vmatprep.subr.bf16.mxu0 0
        %1829 = vmatpush1.bf16.msra.mxu0 0
        %1830 = vmatprep.subr.bf16.mxu0 0
        %1831 = vmatpush1.bf16.msra.mxu0 0
        %1832 = vmatprep.subr.bf16.mxu0 0
        %1833 = vmatpush1.bf16.msra.mxu0 0
        %1834 = vmatprep.subr.bf16.mxu0 0
        %1835 = vmatpush1.bf16.msra.mxu0 0
        %1836 = vmatprep.subr.bf16.mxu0 0
        %1837 = vmatpush1.bf16.msra.mxu0 0
        %1838 = vmatprep.subr.bf16.mxu0 0
        %1839 = vmatpush1.bf16.msra.mxu0 0
        %1840 = vmatprep.mubr.bf16.mxu0 0
        %1841 = vmatmul.mubr.bf16.gmra.mrb[0].mxu0 %v1798
        %v1842 = vpop.f32.mrb[0].mxu0
        %v1843 = vadd.f32 0.0, %v1842
        %v1844 = vpop.f32.mrb[0].mxu0
        %v1845 = vpop.f32.mrb[0].mxu0
        %v1846 = vpop.f32.mrb[0].mxu0
        %1847 = vdwg.mxu0
        %v1848 = vadd.f32 %v1799, %v1843
        %1849 = vst [vmem:[#allocation3] sm:$0xff] %v1848
        %v1850 = vld [vmem:[#allocation4] sm:$0xff]
        %1851 = vadd.xlane.f32.xlu0 %v1797
        %v1852 = vpop.xlane.xlu0 %1851
        %v1853 = vadd.f32 %v1850, %v1852
        %vm1854 = vcmask 7168
        %1855 = vst.msk [vmem:[#allocation4] sm:$0xff] %vm1854, %v1853
        %p1856 = scmp.eq.s32.totalorder %s27, 1
        // Predicated region
        $region73: #{bourne_forward.1} parent=63 // pred_check
          %p1857 = pneg %p1856
        $region74: #{bourne_forward.1} parent=63 // pred_check_branch
          %1859 = sbr.rel (%p1857) target = $region76
        $region75: #{bourne_forward.1} parent=63 // pred_region
          %v1860 = vld [vmem:[#allocation4] sm:$0xff]
          %v1861 = vadd.f32 %v1860, 1.0
          %v1862 = vrcp.pop %v1861
          %v1863 = vld [vmem:[#allocation3] sm:$0xff]
          %1865 = vset.pattern.permute.xlu0 0
          %1866 = vperm.xlu0 %1865, %v1862
          %v1867 = vpop.permute.xlu0 %1866
          %v1869 = vmul.f32 %v1863, %v1867
          %1870 = vst [vmem:[#allocation9] sm:$0xff] %v1869
        $region76: #{bourne_forward.1} parent=63 // pred_fallthru
          _
        // Predicated region
        $region77: #{bourne_forward.1} parent=63 // pred_check
          %p1871 = pneg %p281
        $region78: #{bourne_forward.1} parent=63 // pred_check_branch
          %1873 = sbr.rel (%p1871) target = $region80
        $region79: #{bourne_forward.1} parent=63 // pred_region
          %s1875 = ssub.s32 512, 512
          %1876 = vsyncadd [#allocation6], %s1875
          %s1877 = sshll.u32 [#allocation5], 4
          %s1878 = int_to_ptr.vmem [resolvable:$true] %s1877
          %1883 = dma.vmem_to_hbm [thread:$0]  %s1878, 512, %s11, [#allocation6], 128, 128, 8
        $region80: #{bourne_forward.1} parent=63 // pred_fallthru
          _
        // Predicated region
        $region81: #{bourne_forward.1} parent=63 // pred_check
          %p1884 = pneg %p302
        $region82: #{bourne_forward.1} parent=63 // pred_check_branch
          %1886 = sbr.rel (%p1884) target = $region84
        $region83: #{bourne_forward.1} parent=63 // pred_region
          %s1888 = ssub.s32 512, 512
          %1889 = vsyncadd [#allocation8], %s1888
          %s1890 = sshll.u32 [#allocation7], 4
          %s1891 = int_to_ptr.vmem [resolvable:$true] %s1890
          %1896 = dma.vmem_to_hbm [thread:$0]  %s1891, 512, %s12, [#allocation8], 128, 128, 8
        $region84: #{bourne_forward.1} parent=63 // pred_fallthru
          _
        // Predicated region
        $region85: #{bourne_forward.1} parent=63 // pred_check
          %p1897 = pneg %p323
        $region86: #{bourne_forward.1} parent=63 // pred_check_branch
          %1899 = sbr.rel (%p1897) target = $region88
        $region87: #{bourne_forward.1} parent=63 // pred_region
          %s1901 = ssub.s32 128, 128
          %1902 = vsyncadd [#allocation8], %s1901
          %s1904 = sshll.u32 [#allocation9], 4
          %s1905 = int_to_ptr.vmem [resolvable:$true] %s1904
          %1907 = dma.vmem_to_hbm [thread:$0]  %s1905, 128, %s13, [#allocation8]
        $region88: #{bourne_forward.1} parent=63 // pred_fallthru
          _
        // Predicated region
        $region89: #{bourne_forward.1} parent=63 // pred_check
          %p1908 = pneg %p281
        $region90: #{bourne_forward.1} parent=63 // pred_check_branch
          %1910 = sbr.rel (%p1908) target = $region92
        $region91: #{bourne_forward.1} parent=63 // pred_region
          %1911 = dma.done [#allocation6], 512
        $region92: #{bourne_forward.1} parent=63 // pred_fallthru
          _
        // Predicated region
        $region93: #{bourne_forward.1} parent=63 // pred_check
          %p1912 = pneg %p302
        $region94: #{bourne_forward.1} parent=63 // pred_check_branch
          %1914 = sbr.rel (%p1912) target = $region96
        $region95: #{bourne_forward.1} parent=63 // pred_region
          %1915 = dma.done [#allocation8], 512
        $region96: #{bourne_forward.1} parent=63 // pred_fallthru
          _
        // Predicated region
        $region97: #{bourne_forward.1} parent=63 // pred_check
          %p1916 = pneg %p323
        $region98: #{bourne_forward.1} parent=63 // pred_check_branch
          %1918 = sbr.rel (%p1916) target = $region100
        $region99: #{bourne_forward.1} parent=63 // pred_region
          %1919 = dma.done [#allocation8], 128
        $region100: #{bourne_forward.1} parent=63 // pred_fallthru
          _
      $region64: #{bourne_forward.1} parent=5 // pred_fallthru
        _
      %p1920 = scmp.le.s32.totalorder 2, %s22
      // Predicated region
      $region101: #{bourne_forward.1} parent=5 // pred_check
        %p1921 = pneg %p1920
      $region102: #{bourne_forward.1} parent=5 // pred_check_branch
        %1923 = sbr.rel (%p1921) target = $region104
      $region103: #{bourne_forward.1} parent=5 // pred_region
        %s1924 = ssub.s32 %s22, 2
      $region104: #{bourne_forward.1} parent=5 // pred_fallthru
        _
    $region6: #{bourne_forward.1} parent=1 // loop_footer
      %s26 = sadd.s32 1, %s22
    $region7: #{bourne_forward.1} parent=1 // loop_footer_branch
      %21 = sbr.rel target = $region3
    $region8: #{bourne_forward.1} parent=1 // loop_exit
      _
    %1925 = vsyncpa [#allocation6], 1
    %s1926 = scalar_lea.sflag [#allocation6], 1
    %1927 = vsyncpa %s1926, 1
    %1928 = vsyncpa [#allocation8], 1

</llo_original>
